<compile_context>
chip_gen: v7x
topology: tpu7x:2x2x1
jax: 0.10.0
libtpu: 0.0.40
codegen_flags: <defaults>
</compile_context>

<pallas_src>
import functools

import jax
import jax.numpy as jnp
import numpy as np
from jax.experimental import pallas as pl
from jax.experimental.pallas import tpu as pltpu

RESOLUTION = 112
FEAT_DIM = 512


# ----------------------------------------------------------------------------
# Chip dispatch (trace-time, pure Python)
# ----------------------------------------------------------------------------
def _is_v7x():
    try:
        kind = jax.devices()[0].device_kind.lower()
    except Exception:
        return False
    return ("v7" in kind) or ("7x" in kind)


# ----------------------------------------------------------------------------
# Glue: adaptive-average-pool expressed as an (out, in) averaging matrix.
# (Matches torch.nn.AdaptiveAvgPool2d bin boundaries, including out > in.)
# ----------------------------------------------------------------------------
def _adaptive_pool_matrix(out_size, in_size):
    P = np.zeros((out_size, in_size), dtype=np.float32)
    for i in range(out_size):
        s = (i * in_size) // out_size
        e = -(-((i + 1) * in_size) // out_size)  # ceil
        P[i, s:e] = 1.0 / (e - s)
    return jnp.asarray(P)


def _preprocess_matrices(in_size):
    """Fold pool->256 (if needed), crop [35:223]/[32:220], pool->112 into A, B."""
    P = _adaptive_pool_matrix(RESOLUTION, 223 - 35)  # (112, 188)
    if in_size == 256:
        U = jnp.eye(256, dtype=jnp.float32)
    else:
        U = _adaptive_pool_matrix(256, in_size)      # adaptive pool to 256
    A = P @ U[35:223, :]                             # (112, in_size)
    B = P @ U[32:220, :]                             # (112, in_size)
    return A, B


# ----------------------------------------------------------------------------
# Kernel 1: plane-batched pre-processing  Y_p = A @ X_p @ B^T
#   x_ref : (planes * S, S)   -- `planes` (n, c) planes stacked along rows
#   a_ref : (112, S)
#   bt_ref: (S, 112)          -- B pre-transposed on the host (no in-kernel .T)
#   o_ref : (planes * 112, 112)
# ----------------------------------------------------------------------------
def _preprocess_kernel(x_ref, a_ref, bt_ref, o_ref, *, planes, s):
    # Single big MXU op for all planes: (planes*S, S) @ (S, 112).
    z = jnp.dot(x_ref[...], bt_ref[...], preferred_element_type=jnp.float32)
    # Second (small) matmul per plane, statically unrolled.
    # NOTE: output last dim is 112 (<128) -> masked stores; a lane-dense
    # (planes, 12544) layout is possible but costs an in-kernel relayout,
    # and kernel 1 is a few % of total, so it is intentionally left as-is.
    for p in range(planes):
        zp = z[p * s:(p + 1) * s, :]                              # (S, 112)
        y = jnp.dot(a_ref[...], zp, preferred_element_type=jnp.float32)
        o_ref[p * RESOLUTION:(p + 1) * RESOLUTION, :] = y         # (112, 112)


def _choose_planes(nc, s, min_steps):
    """Largest divisor of `nc` whose input block stays <= ~4 MiB AND whose
    grid length (nc // planes) is at least `min_steps`, so the pipeline
    actually double-buffers (and both v7x cores get work)."""
    max_p = max(1, (4 * 1024 * 1024) // (s * s * 4))
    best = 1
    for p in range(1, nc + 1):
        if nc % p == 0 and p <= max_p and nc // p >= min_steps:
            best = p
    return best


def preprocess(x, planes=None):
    # x: (N, C, S, S) float32 -> (N, C, 112, 112) float32
    N, C, S, _ = x.shape
    NC = N * C
    A, B = _preprocess_matrices(S)
    BT = B.T                                                       # (S, 112), host-side

    if planes is None:
        min_steps = 4 if _is_v7x() else 2
        planes = _choose_planes(NC, S, min_steps)

    x2 = x.reshape(NC * S, S)
    out = pl.pallas_call(
        functools.partial(_preprocess_kernel, planes=planes, s=S),
        out_shape=jax.ShapeDtypeStruct((NC * RESOLUTION, RESOLUTION), jnp.float32),
        grid_spec=pltpu.PrefetchScalarGridSpec(
            num_scalar_prefetch=0,
            grid=(NC // planes,),
            in_specs=[
                pl.BlockSpec((planes * S, S), lambda i: (i, 0)),
                pl.BlockSpec((RESOLUTION, S), lambda i: (0, 0)),
                pl.BlockSpec((S, RESOLUTION), lambda i: (0, 0)),
            ],
            out_specs=pl.BlockSpec((planes * RESOLUTION, RESOLUTION),
                                   lambda i: (i, 0)),
        ),
        compiler_params=pltpu.CompilerParams(dimension_semantics=("parallel",)),
    )(x2, A, BT)
    return out.reshape(N, C, RESOLUTION, RESOLUTION)


# ----------------------------------------------------------------------------
# Kernel 2: "facenet" embedding — tiled matmul over the flattened image.
# Grid = (FEAT_DIM tiles [parallel], K tiles [arbitrary, reduction last]).
# Weight is streamed in bf16 (the entire HBM traffic), accumulation in f32
# directly in the resident output block (no scratch copy).
# TODO(synk): stands in for the real IR-SE50 ArcFace backbone.
# ----------------------------------------------------------------------------
def _feats_kernel(x_ref, w_ref, o_ref):
    @pl.when(pl.program_id(1) == 0)
    def _():
        o_ref[...] = jnp.zeros_like(o_ref)

    o_ref[...] += jnp.dot(x_ref[...].astype(jnp.bfloat16), w_ref[...],
                          preferred_element_type=jnp.float32)


def _default_feats_tiles():
    # K = 3*112*112 = 37632 = 3 * 12544.
    if _is_v7x():
        # 2 TensorCores: split FEAT_DIM (tn=256) across cores via the parallel
        # j axis; 3 coarse reduction steps per core.  bf16 block = 6.1 MiB.
        return 12544, 256
    # Single TensorCore (v5e/v6e): full FEAT_DIM per step, 3 reduction steps.
    # bf16 block = 12.25 MiB, double-buffered ~24.5 MiB -> needs the explicit
    # 32 MiB vmem_limit (v5e scoped default is 16 MiB).
    return 12544, 512


def facenet_feats(xflat, w, *, tk=None, tn=None):
    # xflat: (M, K) f32 -> feats (M, 512) f32.
    M, K = xflat.shape
    if tk is None or tn is None:
        dtk, dtn = _default_feats_tiles()
        tk = tk if tk is not None else dtk
        tn = tn if tn is not None else dtn
    assert K == w.shape[0] and K % tk == 0 and FEAT_DIM % tn == 0
    if w.dtype != jnp.bfloat16:
        w = w.astype(jnp.bfloat16)      # halve the dominant HBM stream
    return pl.pallas_call(
        _feats_kernel,
        out_shape=jax.ShapeDtypeStruct((M, FEAT_DIM), jnp.float32),
        grid_spec=pltpu.PrefetchScalarGridSpec(
            num_scalar_prefetch=0,
            grid=(FEAT_DIM // tn, K // tk),
            in_specs=[
                pl.BlockSpec((M, tk), lambda j, k: (0, k)),
                # If an xprof trace shows exposed DMA gaps between weight
                # blocks, add pipeline_mode=pl.Buffered(3) here (budget one
                # extra weight block of VMEM; cap total <= ~48 MiB on v7x).
                pl.BlockSpec((tk, tn), lambda j, k: (k, j)),
            ],
            out_specs=pl.BlockSpec((M, tn), lambda j, k: (0, j)),
        ),
        compiler_params=pltpu.CompilerParams(
            dimension_semantics=("parallel", "arbitrary"),
            vmem_limit_bytes=32 << 20,
        ),
    )(xflat, w)


# ----------------------------------------------------------------------------
# Kernel 3: loss = 1 - mean_r( cos_sim(x_feats, y_feats) )   (tiny)
# ----------------------------------------------------------------------------
def _id_loss_kernel(xf_ref, yf_ref, o_ref):
    x = xf_ref[...]
    y = yf_ref[...]
    xn = x * jax.lax.rsqrt(jnp.sum(x * x, axis=-1, keepdims=True) + 1e-12)
    yn = y * jax.lax.rsqrt(jnp.sum(y * y, axis=-1, keepdims=True) + 1e-12)
    # Contract on the feature axis of both operands; avoids materializing
    # yn.T through the XLU.
    sim = jax.lax.dot_general(xn, yn,
                              dimension_numbers=(((1,), (1,)), ((), ())),
                              preferred_element_type=jnp.float32)   # (B, R)
    o_ref[...] = 1.0 - jnp.mean(sim, axis=1, keepdims=True)          # (B, 1)


def id_loss(x_feats, y_feats):
    B, H = x_feats.shape
    R = y_feats.shape[0]
    out = pl.pallas_call(
        _id_loss_kernel,
        out_shape=jax.ShapeDtypeStruct((B, 1), jnp.float32),
        grid_spec=pltpu.PrefetchScalarGridSpec(
            num_scalar_prefetch=0,
            grid=(1,),
            in_specs=[
                pl.BlockSpec((B, H), lambda i: (0, 0)),
                pl.BlockSpec((R, H), lambda i: (0, 0)),
            ],
            out_specs=pl.BlockSpec((B, 1), lambda i: (0, 0)),
        ),
    )(x_feats, y_feats)
    return out[:, 0]


# ----------------------------------------------------------------------------
# Full forward (IDSingleEnergy.forward)
# ----------------------------------------------------------------------------
def precompute_reference_feats(references, w):
    """References are constant across calls; hoist their embedding out of the
    per-call path when the loss is evaluated repeatedly."""
    y = preprocess(references)
    return facenet_feats(y.reshape(y.shape[0], -1), w)


def id_single_energy_forward(img, references, w, y_feats=None):
    # TODO(synk): Image.open / Resize / ToTensor of ref_paths is file I/O;
    # `references` are synthesised in-script at the shape ref_transform produces.
    B = img.shape[0]
    x = preprocess(img)                                   # (B, 3, 112, 112)
    if y_feats is None:
        # Single-shot path: embed x and y through ONE stream of the bf16
        # weight by fusing them along the batch axis.
        y = preprocess(references)                        # (R, 3, 112, 112)
        xy = jnp.concatenate(
            [x.reshape(B, -1), y.reshape(y.shape[0], -1)], axis=0)
        feats = facenet_feats(xy, w)
        x_feats, y_feats = feats[:B], feats[B:]
    else:
        # Repeated-call path: y_feats precomputed once (precompute_reference_feats).
        x_feats = facenet_feats(x.reshape(B, -1), w)
    return id_loss(x_feats, y_feats)                      # (B,)


# ----------------------------------------------------------------------------
# Pure-JAX reference of the same (synthetic-backbone) pipeline, for checking.
# Uses the same bf16 weight / bf16 LHS + f32 accumulation as the kernel so the
# 2e-3 tolerance stays valid.
# ----------------------------------------------------------------------------
def _reference_forward(img, references, w):
    def prep(x):
        A, B = _preprocess_matrices(x.shape[2])
        return jnp.einsum('ph,nchw,qw->ncpq', A, x, B)

    wq = w.astype(jnp.bfloat16)

    def feats(x):
        xb = x.reshape(x.shape[0], -1).astype(jnp.bfloat16)
        f = jnp.dot(xb, wq, preferred_element_type=jnp.float32)
        return f / jnp.sqrt(jnp.sum(f * f, axis=-1, keepdims=True) + 1e-12)

    xf, yf = feats(prep(img)), feats(prep(references))
    sim = jnp.einsum('bh,rh->br', xf, yf)
    return 1.0 - sim.mean(axis=1)


if __name__ == "__main__":
    key = jax.random.PRNGKey(0)
    k_img, k_ref, k_w = jax.random.split(key, 3)

    B, R, C = 2, 2, 3
    img = jax.random.uniform(k_img, (B, C, 256, 256), dtype=jnp.float32)
    # references: what ref_transform (Resize(112) + ToTensor) would produce.
    references = jax.random.uniform(k_ref, (R, C, RESOLUTION, RESOLUTION),
                                    dtype=jnp.float32)

    K = C * RESOLUTION * RESOLUTION
    w = jax.random.normal(k_w, (K, FEAT_DIM), dtype=jnp.float32) / np.sqrt(K)

    loss = jax.block_until_ready(id_single_energy_forward(img, references, w))
    ref = jax.block_until_ready(_reference_forward(img, references, w))

    assert loss.shape == (B,)
    np.testing.assert_allclose(np.asarray(loss), np.asarray(ref),
                               rtol=2e-3, atol=2e-3)
    print("KERNEL_OK")
</pallas_src>

<mosaic_0001>
module attributes {stable_mosaic.version = 11 : i64} {
  func.func @_preprocess_kernel(%arg0: i32, %arg1: memref<768x256xf32, #tpu.memory_space<vmem>>, %arg2: memref<112x256xf32, #tpu.memory_space<vmem>>, %arg3: memref<256x112xf32, #tpu.memory_space<vmem>>, %arg4: memref<336x112xf32, #tpu.memory_space<vmem>>) attributes {dimension_semantics = [#tpu.dimension_semantics<parallel>], iteration_bounds = array<i64: 2>, scalar_prefetch = 0 : i64, scratch_operands = 0 : i64, tpu.core_type = #tpu.core_type<tc>, window_params = [{transform_indices = @transform_0, window_bounds = array<i64: 768, 256>}, {pipeline_mode = #tpu.pipeline_mode<synchronous>, transform_indices = @transform_1, window_bounds = array<i64: 112, 256>}, {pipeline_mode = #tpu.pipeline_mode<synchronous>, transform_indices = @transform_2, window_bounds = array<i64: 256, 112>}, {transform_indices = @transform_3, window_bounds = array<i64: 336, 112>}]} {
    %c0 = arith.constant 0 : index
    %c0_0 = arith.constant 0 : index
    %0 = vector.load %arg1[%c0, %c0_0] : memref<768x256xf32, #tpu.memory_space<vmem>>, vector<768x256xf32>
    %c0_1 = arith.constant 0 : index
    %c0_2 = arith.constant 0 : index
    %1 = vector.load %arg3[%c0_1, %c0_2] : memref<256x112xf32, #tpu.memory_space<vmem>>, vector<256x112xf32>
    %cst = arith.constant dense<0.000000e+00> : vector<768x112xf32>
    %2 = tpu.matmul %0, %1, %cst {dimension_numbers = #tpu.dot_dimension_numbers<[1], [0], [0], [1], [0, 0, 1, 1], [], []>} : vector<768x256xf32>, vector<256x112xf32>, vector<768x112xf32> -> vector<768x112xf32>
    %3 = vector.extract_strided_slice %2 {offsets = [0, 0], sizes = [256, 112], strides = [1, 1]} : vector<768x112xf32> to vector<256x112xf32>
    %c0_3 = arith.constant 0 : index
    %c0_4 = arith.constant 0 : index
    %4 = vector.load %arg2[%c0_3, %c0_4] : memref<112x256xf32, #tpu.memory_space<vmem>>, vector<112x256xf32>
    %cst_5 = arith.constant dense<0.000000e+00> : vector<112x112xf32>
    %5 = tpu.matmul %4, %3, %cst_5 {dimension_numbers = #tpu.dot_dimension_numbers<[1], [0], [0], [1], [0, 0, 1, 1], [], []>} : vector<112x256xf32>, vector<256x112xf32>, vector<112x112xf32> -> vector<112x112xf32>
    %c0_6 = arith.constant 0 : index
    %c0_7 = arith.constant 0 : index
    %6 = vector.load %arg4[%c0_6, %c0_7] : memref<336x112xf32, #tpu.memory_space<vmem>>, vector<112x112xf32>
    tpu.vector_store %arg4[%c0_6, %c0_7], %5 {strides = array<i32>} : memref<336x112xf32, #tpu.memory_space<vmem>>, vector<112x112xf32>,
    %7 = vector.extract_strided_slice %2 {offsets = [256, 0], sizes = [256, 112], strides = [1, 1]} : vector<768x112xf32> to vector<256x112xf32>
    %c0_8 = arith.constant 0 : index
    %c0_9 = arith.constant 0 : index
    %8 = vector.load %arg2[%c0_8, %c0_9] : memref<112x256xf32, #tpu.memory_space<vmem>>, vector<112x256xf32>
    %cst_10 = arith.constant dense<0.000000e+00> : vector<112x112xf32>
    %9 = tpu.matmul %8, %7, %cst_10 {dimension_numbers = #tpu.dot_dimension_numbers<[1], [0], [0], [1], [0, 0, 1, 1], [], []>} : vector<112x256xf32>, vector<256x112xf32>, vector<112x112xf32> -> vector<112x112xf32>
    %c112 = arith.constant 112 : index
    %c0_11 = arith.constant 0 : index
    %10 = vector.load %arg4[%c112, %c0_11] : memref<336x112xf32, #tpu.memory_space<vmem>>, vector<112x112xf32>
    tpu.vector_store %arg4[%c112, %c0_11], %9 {strides = array<i32>} : memref<336x112xf32, #tpu.memory_space<vmem>>, vector<112x112xf32>,
    %11 = vector.extract_strided_slice %2 {offsets = [512, 0], sizes = [256, 112], strides = [1, 1]} : vector<768x112xf32> to vector<256x112xf32>
    %c0_12 = arith.constant 0 : index
    %c0_13 = arith.constant 0 : index
    %12 = vector.load %arg2[%c0_12, %c0_13] : memref<112x256xf32, #tpu.memory_space<vmem>>, vector<112x256xf32>
    %cst_14 = arith.constant dense<0.000000e+00> : vector<112x112xf32>
    %13 = tpu.matmul %12, %11, %cst_14 {dimension_numbers = #tpu.dot_dimension_numbers<[1], [0], [0], [1], [0, 0, 1, 1], [], []>} : vector<112x256xf32>, vector<256x112xf32>, vector<112x112xf32> -> vector<112x112xf32>
    %c224 = arith.constant 224 : index
    %c0_15 = arith.constant 0 : index
    %14 = vector.load %arg4[%c224, %c0_15] : memref<336x112xf32, #tpu.memory_space<vmem>>, vector<112x112xf32>
    tpu.vector_store %arg4[%c224, %c0_15], %13 {strides = array<i32>} : memref<336x112xf32, #tpu.memory_space<vmem>>, vector<112x112xf32>,
    return
  }
  func.func @transform_0(%arg0: i32) -> (i32, i32) {
    %c0_i32 = arith.constant 0 : i32
    %c0_i32_0 = arith.constant 0 : i32
    return %arg0, %c0_i32 : i32, i32
  }
  func.func @transform_1(%arg0: i32) -> (i32, i32) {
    %c0_i32 = arith.constant 0 : i32
    %c0_i32_0 = arith.constant 0 : i32
    %c0_i32_1 = arith.constant 0 : i32
    return %c0_i32, %c0_i32_0 : i32, i32
  }
  func.func @transform_2(%arg0: i32) -> (i32, i32) {
    %c0_i32 = arith.constant 0 : i32
    %c0_i32_0 = arith.constant 0 : i32
    %c0_i32_1 = arith.constant 0 : i32
    return %c0_i32, %c0_i32_0 : i32, i32
  }
  func.func @transform_3(%arg0: i32) -> (i32, i32) {
    %c0_i32 = arith.constant 0 : i32
    %c0_i32_0 = arith.constant 0 : i32
    return %arg0, %c0_i32 : i32, i32
  }
}

</mosaic_0001>

<llo_original>
// kernel: tpu_custom_call.1
$region0: #{tpu_custom_call.1}
  #allocation0 [shape = 'u32[]', space=smem, size = 0x4, offset = 0x4, fixed_abs, tag = 'smem constant byte address 0x4 - core index']
  #allocation1 [shape = 'u32[144,128]{1,0:T(1,128)}', space=vmem, size = 0x12000, scoped, tag = 'internal scratch']
  %s0 = inlined_call_operand.hbm [shape: f32[1536,256], index: 0, kind: input, shape index: {}]
  %s1 = inlined_call_operand.hbm [shape: f32[112,256], index: 1, kind: input, shape index: {}]
  %s2 = inlined_call_operand.vmem [shape: f32[256,112], index: 2, kind: input, shape index: {}]
  %s3 = inlined_call_operand.hbm [shape: f32[672,112], index: 3, kind: output, shape index: {}]
  %s4 = sld [smem:[#allocation0]]
  $region53: #{tpu_custom_call.1} parent=0
    _
  %s6 = ssub.s32 1, %s4
  %s7 = scalar_select 0, %s6, %s4
  $region1: #{tpu_custom_call.1} parent=0
    #allocation2 [shape = 'u8[1572864]{0}', space=vmem, size = 0x180000, scoped, tag = 'input window, operand 0']
    #allocation3 [shape = 's32[2]{0}', space=sflag, size = 0x8, scoped, tag = 'scoped memory for tpu_custom_call.1']
    #allocation4 [shape = 's32[2]{0}', space=sflag, size = 0x8, scoped, tag = 'scoped memory for tpu_custom_call.1']
    #allocation5 [shape = 'u8[114688]{0}', space=vmem, size = 0x1c000, scoped, tag = 'input window, operand 1, single buffered']
    #allocation6 [shape = 's32[1]{0}', space=sflag, size = 0x4, scoped, tag = 'scoped memory for tpu_custom_call.1']
    #allocation7 [shape = 'u8[344064]{0}', space=vmem, size = 0x54000, scoped, tag = 'output window, operand 0']
    %8 = vsyncpa [#allocation3], 0
    %s9 = scalar_lea.sflag [#allocation3], 1
    %10 = vsyncpa %s9, 0
    %11 = vsyncpa [#allocation6], 0
    %12 = vsyncpa [#allocation4], 0
    %s13 = scalar_lea.sflag [#allocation4], 1
    %14 = vsyncpa %s13, 0
    loop: start=0, step=1, limit=4
    $region2: #{tpu_custom_call.1} parent=1 // loop_pre_header
      _
    $region3: #{tpu_custom_call.1} parent=1 // loop_header
      %s16 = sphi 0, %s20
      %p17 = scmp.ge.s32.totalorder %s16, 4
      %s26 = sphi 0, %s28
      %s29 = sphi 0, %s26
      %s30 = sphi 0, %s29
      %s46 = sphi 0, %s30
      %s50 = sphi 0, %s50
      %s52 = sphi 0, %s50
      %s53 = sphi 0, %s52
      %s67 = sphi 0, %s53
      %s71 = sphi 0, %s71
      %s73 = sphi 0, %s71
      %s74 = sphi 0, %s73
      %s88 = sphi 0, %s74
      %s94 = sphi 0, %s96
      %s97 = sphi 0, %s94
      %s98 = sphi 0, %s97
      %s114 = sphi 0, %s98
    $region4: #{tpu_custom_call.1} parent=1 // loop_header_branch
      %19 = sbr.rel (%p17) target = $region8
    $region5: #{tpu_custom_call.1} parent=1 // loop_body
      %s21 = ssub.s32 %s16, 1
      %s22 = ssub.s32 %s16, 2
      %s23 = sadd.s32 %s16, 1
      %s24 = ssub.s32 %s16, %s23
      %p25 = scmp.eq.s32.totalorder %s24, 0
      %s27 = sadd.s32 %s26, 1
      %s28 = scalar_select %p25, %s26, %s27
      %p31 = pneg %p25
      %p32 = scmp.eq.s32.totalorder %s16, 1
      %p33 = por %p31, %p32
      %p34 = scmp.ne.s32.totalorder %s26, %s29
      %p35 = scmp.eq.s32.totalorder %s16, 0
      %p36 = por %p34, %p35
      %p37 = scmp.ne.s32.totalorder %s26, %s29
      %p38 = scmp.eq.s32.totalorder %s21, 1
      %p39 = por %p37, %p38
      %p40 = scmp.ne.s32.totalorder %s29, %s30
      %p41 = scmp.eq.s32.totalorder %s21, 0
      %p42 = por %p40, %p41
      %p43 = scmp.ne.s32.totalorder %s29, %s30
      %p44 = scmp.eq.s32.totalorder %s22, 1
      %p45 = por %p43, %p44
      %p47 = scmp.ne.s32.totalorder %s30, %s46
      %p48 = scmp.eq.s32.totalorder %s22, 0
      %p49 = por %p47, %p48
      %s51 = sadd.s32 %s50, 1
      %p54 = scmp.eq.s32.totalorder %s16, 1
      %p55 = scmp.ne.s32.totalorder %s50, %s52
      %p56 = scmp.eq.s32.totalorder %s16, 0
      %p57 = por %p55, %p56
      %p58 = scmp.ne.s32.totalorder %s50, %s52
      %p59 = scmp.eq.s32.totalorder %s21, 1
      %p60 = por %p58, %p59
      %p61 = scmp.ne.s32.totalorder %s52, %s53
      %p62 = scmp.eq.s32.totalorder %s21, 0
      %p63 = por %p61, %p62
      %p64 = scmp.ne.s32.totalorder %s52, %s53
      %p65 = scmp.eq.s32.totalorder %s22, 1
      %p66 = por %p64, %p65
      %p68 = scmp.ne.s32.totalorder %s53, %s67
      %p69 = scmp.eq.s32.totalorder %s22, 0
      %p70 = por %p68, %p69
      %s72 = sadd.s32 %s71, 1
      %p75 = scmp.eq.s32.totalorder %s16, 1
      %p76 = scmp.ne.s32.totalorder %s71, %s73
      %p77 = scmp.eq.s32.totalorder %s16, 0
      %p78 = por %p76, %p77
      %p79 = scmp.ne.s32.totalorder %s71, %s73
      %p80 = scmp.eq.s32.totalorder %s21, 1
      %p81 = por %p79, %p80
      %p82 = scmp.ne.s32.totalorder %s73, %s74
      %p83 = scmp.eq.s32.totalorder %s21, 0
      %p84 = por %p82, %p83
      %p85 = scmp.ne.s32.totalorder %s73, %s74
      %p86 = scmp.eq.s32.totalorder %s22, 1
      %p87 = por %p85, %p86
      %p89 = scmp.ne.s32.totalorder %s74, %s88
      %p90 = scmp.eq.s32.totalorder %s22, 0
      %p91 = por %p89, %p90
      %s92 = ssub.s32 %s16, %s23
      %p93 = scmp.eq.s32.totalorder %s92, 0
      %s95 = sadd.s32 %s94, 1
      %s96 = scalar_select %p93, %s94, %s95
      %p99 = pneg %p93
      %p100 = scmp.eq.s32.totalorder %s16, 1
      %p101 = por %p99, %p100
      %p102 = scmp.ne.s32.totalorder %s94, %s97
      %p103 = scmp.eq.s32.totalorder %s16, 0
      %p104 = por %p102, %p103
      %p105 = scmp.ne.s32.totalorder %s94, %s97
      %p106 = scmp.eq.s32.totalorder %s21, 1
      %p107 = por %p105, %p106
      %p108 = scmp.ne.s32.totalorder %s97, %s98
      %p109 = scmp.eq.s32.totalorder %s21, 0
      %p110 = por %p108, %p109
      %p111 = scmp.ne.s32.totalorder %s97, %s98
      %p112 = scmp.eq.s32.totalorder %s22, 1
      %p113 = por %p111, %p112
      %p115 = scmp.ne.s32.totalorder %s98, %s114
      %p116 = scmp.eq.s32.totalorder %s22, 0
      %p117 = por %p115, %p116
      %p118 = scmp.le.s32.totalorder 1, %s16
      %p119 = scmp.lt.s32.totalorder %s16, 3
      %p120 = pnand %p118, %p119
      %p121 = pneg %p120
      // Predicated region
      $region9: #{tpu_custom_call.1} parent=5 // pred_check
        _
      $region10: #{tpu_custom_call.1} parent=5 // pred_check_branch
        %123 = sbr.rel (%p120) target = $region12
      $region11: #{tpu_custom_call.1} parent=5 // pred_region
        %s124 = ssub.s32 %s16, 1
        // Predicated region
        $region13: #{tpu_custom_call.1} parent=11 // pred_check
          %p125 = pneg %p63
        $region14: #{tpu_custom_call.1} parent=11 // pred_check_branch
          %127 = sbr.rel (%p125) target = $region16
        $region15: #{tpu_custom_call.1} parent=11 // pred_region
          %s129 = ssub.s32 3584, 3584
          %130 = vsyncadd [#allocation6], %s129
          %s131 = sshll.u32 [#allocation5], 4
          %s132 = int_to_ptr.vmem [resolvable:$true] %s131
          %137 = dma.hbm_to_vmem [thread:$0]  %s1, 3584, %s132, [#allocation6], 256, 256, 16
        $region16: #{tpu_custom_call.1} parent=11 // pred_fallthru
          _
        // Predicated region
        $region17: #{tpu_custom_call.1} parent=11 // pred_check
          %p138 = pneg %p84
        $region18: #{tpu_custom_call.1} parent=11 // pred_check_branch
          %140 = sbr.rel (%p138) target = $region20
        $region19: #{tpu_custom_call.1} parent=11 // pred_region
          _
        $region20: #{tpu_custom_call.1} parent=11 // pred_fallthru
          _
      $region12: #{tpu_custom_call.1} parent=5 // pred_fallthru
        _
      %p141 = scmp.lt.s32.totalorder %s16, 2
      // Predicated region
      $region21: #{tpu_custom_call.1} parent=5 // pred_check
        %p142 = pneg %p141
      $region22: #{tpu_custom_call.1} parent=5 // pred_check_branch
        %144 = sbr.rel (%p142) target = $region24
      $region23: #{tpu_custom_call.1} parent=5 // pred_region
        // Predicated region
        $region25: #{tpu_custom_call.1} parent=23 // pred_check
          %p145 = pneg %p36
        $region26: #{tpu_custom_call.1} parent=23 // pred_check_branch
          %147 = sbr.rel (%p145) target = $region28
        $region27: #{tpu_custom_call.1} parent=23 // pred_region
          %s148 = sand.u32 %s26, 1
          %s149 = scalar_lea.sflag [#allocation3], %s148
          %s150 = sand.u32 %s26, 1
          %s151 = smul.addr %s150, 1536
          %s152 = scalar_lea.vmem [#allocation2], %s151
          %s153 = smul.u32 96, %s16
          %s155 = ssub.s32 24576, 24576
          %156 = vsyncadd %s149, %s155
          %s157 = smul.addr %s153, 2
          %s158 = smul.addr %s157, 128
          %s159 = scalar_lea.hbm %s0, %s158
          %s160 = sshll.u32 %s152, 4
          %s161 = int_to_ptr.vmem [resolvable:$true] %s160
          %166 = dma.hbm_to_vmem [thread:$0]  %s159, 24576, %s161, %s149, 256, 256, 16
        $region28: #{tpu_custom_call.1} parent=23 // pred_fallthru
          _
      $region24: #{tpu_custom_call.1} parent=5 // pred_fallthru
        _
      %p167 = scmp.le.s32.totalorder 1, %s16
      %p168 = scmp.lt.s32.totalorder %s16, 3
      %p169 = pnand %p167, %p168
      %p170 = pneg %p169
      // Predicated region
      $region29: #{tpu_custom_call.1} parent=5 // pred_check
        _
      $region30: #{tpu_custom_call.1} parent=5 // pred_check_branch
        %172 = sbr.rel (%p169) target = $region32
      $region31: #{tpu_custom_call.1} parent=5 // pred_region
        %s173 = ssub.s32 %s16, 1
        %s174 = sand.u32 %s29, 1
        %s175 = scalar_lea.sflag [#allocation3], %s174
        %s176 = sand.u32 %s29, 1
        %s177 = smul.addr %s176, 1536
        %s178 = scalar_lea.vmem [#allocation2], %s177
        // Predicated region
        $region33: #{tpu_custom_call.1} parent=31 // pred_check
          %p179 = pneg %p42
        $region34: #{tpu_custom_call.1} parent=31 // pred_check_branch
          %181 = sbr.rel (%p179) target = $region36
        $region35: #{tpu_custom_call.1} parent=31 // pred_region
          %182 = dma.done %s175, 24576
        $region36: #{tpu_custom_call.1} parent=31 // pred_fallthru
          _
        // Predicated region
        $region37: #{tpu_custom_call.1} parent=31 // pred_check
          %p183 = pneg %p63
        $region38: #{tpu_custom_call.1} parent=31 // pred_check_branch
          %185 = sbr.rel (%p183) target = $region40
        $region39: #{tpu_custom_call.1} parent=31 // pred_region
          %186 = dma.done [#allocation6], 3584
        $region40: #{tpu_custom_call.1} parent=31 // pred_fallthru
          _
        %s187 = sand.u32 %s29, 1
        %s188 = scalar_lea.sflag [#allocation3], %s187
        %s189 = sand.u32 %s29, 1
        %s190 = smul.addr %s189, 1536
        %s191 = scalar_lea.vmem [#allocation2], %s190
        %p192 = pneg %p42
        %p193 = pneg %p39
        %p194 = pneg %p63
        %p195 = pneg %p60
        %p196 = pneg %p84
        %p197 = pneg %p81
        %p198 = pneg %p110
        %p199 = pneg %p107
        %s200 = sand.u32 %s97, 1
        %s201 = scalar_lea.sflag [#allocation4], %s200
        %s202 = sand.u32 %s97, 1
        %s203 = smul.addr %s202, 336
        %s204 = scalar_lea.vmem [#allocation7], %s203
        %s205 = smul.u32 96, %s21
        %s206 = smul.u32 42, %s21
        %v207 = vld [vmem:[%s178] sm:$0xff]
        %v208 = vld [vmem:[%s178 + $0x8] sm:$0xff]
        %v209 = vld [vmem:[%s178 + $0x10] sm:$0xff]
        %v210 = vld [vmem:[%s178 + $0x18] sm:$0xff]
        %v211 = vld [vmem:[%s178 + $0x20] sm:$0xff]
        %v212 = vld [vmem:[%s178 + $0x28] sm:$0xff]
        %v213 = vld [vmem:[%s178 + $0x30] sm:$0xff]
        %v214 = vld [vmem:[%s178 + $0x38] sm:$0xff]
        %v215 = vld [vmem:[%s178 + $0x40] sm:$0xff]
        %v216 = vld [vmem:[%s178 + $0x48] sm:$0xff]
        %v217 = vld [vmem:[%s178 + $0x50] sm:$0xff]
        %v218 = vld [vmem:[%s178 + $0x58] sm:$0xff]
        %v219 = vld [vmem:[%s178 + $0x60] sm:$0xff]
        %v220 = vld [vmem:[%s178 + $0x68] sm:$0xff]
        %v221 = vld [vmem:[%s178 + $0x70] sm:$0xff]
        %v222 = vld [vmem:[%s178 + $0x78] sm:$0xff]
        %v223 = vld [vmem:[%s178 + $0x80] sm:$0xff]
        %v224 = vld [vmem:[%s178 + $0x88] sm:$0xff]
        %v225 = vld [vmem:[%s178 + $0x90] sm:$0xff]
        %v226 = vld [vmem:[%s178 + $0x98] sm:$0xff]
        %v227 = vld [vmem:[%s178 + $0xa0] sm:$0xff]
        %v228 = vld [vmem:[%s178 + $0xa8] sm:$0xff]
        %v229 = vld [vmem:[%s178 + $0xb0] sm:$0xff]
        %v230 = vld [vmem:[%s178 + $0xb8] sm:$0xff]
        %v231 = vld [vmem:[%s178 + $0xc0] sm:$0xff]
        %v232 = vld [vmem:[%s178 + $0xc8] sm:$0xff]
        %v233 = vld [vmem:[%s178 + $0xd0] sm:$0xff]
        %v234 = vld [vmem:[%s178 + $0xd8] sm:$0xff]
        %v235 = vld [vmem:[%s178 + $0xe0] sm:$0xff]
        %v236 = vld [vmem:[%s178 + $0xe8] sm:$0xff]
        %v237 = vld [vmem:[%s178 + $0xf0] sm:$0xff]
        %v238 = vld [vmem:[%s178 + $0xf8] sm:$0xff]
        %v239 = vld [vmem:[%s178 + $0x100] sm:$0xff]
        %v240 = vld [vmem:[%s178 + $0x108] sm:$0xff]
        %v241 = vld [vmem:[%s178 + $0x110] sm:$0xff]
        %v242 = vld [vmem:[%s178 + $0x118] sm:$0xff]
        %v243 = vld [vmem:[%s178 + $0x120] sm:$0xff]
        %v244 = vld [vmem:[%s178 + $0x128] sm:$0xff]
        %v245 = vld [vmem:[%s178 + $0x130] sm:$0xff]
        %v246 = vld [vmem:[%s178 + $0x138] sm:$0xff]
        %v247 = vld [vmem:[%s178 + $0x140] sm:$0xff]
        %v248 = vld [vmem:[%s178 + $0x148] sm:$0xff]
        %v249 = vld [vmem:[%s178 + $0x150] sm:$0xff]
        %v250 = vld [vmem:[%s178 + $0x158] sm:$0xff]
        %v251 = vld [vmem:[%s178 + $0x160] sm:$0xff]
        %v252 = vld [vmem:[%s178 + $0x168] sm:$0xff]
        %v253 = vld [vmem:[%s178 + $0x170] sm:$0xff]
        %v254 = vld [vmem:[%s178 + $0x178] sm:$0xff]
        %v255 = vld [vmem:[%s178 + $0x180] sm:$0xff]
        %v256 = vld [vmem:[%s178 + $0x188] sm:$0xff]
        %v257 = vld [vmem:[%s178 + $0x190] sm:$0xff]
        %v258 = vld [vmem:[%s178 + $0x198] sm:$0xff]
        %v259 = vld [vmem:[%s178 + $0x1a0] sm:$0xff]
        %v260 = vld [vmem:[%s178 + $0x1a8] sm:$0xff]
        %v261 = vld [vmem:[%s178 + $0x1b0] sm:$0xff]
        %v262 = vld [vmem:[%s178 + $0x1b8] sm:$0xff]
        %v263 = vld [vmem:[%s178 + $0x1c0] sm:$0xff]
        %v264 = vld [vmem:[%s178 + $0x1c8] sm:$0xff]
        %v265 = vld [vmem:[%s178 + $0x1d0] sm:$0xff]
        %v266 = vld [vmem:[%s178 + $0x1d8] sm:$0xff]
        %v267 = vld [vmem:[%s178 + $0x1e0] sm:$0xff]
        %v268 = vld [vmem:[%s178 + $0x1e8] sm:$0xff]
        %v269 = vld [vmem:[%s178 + $0x1f0] sm:$0xff]
        %v270 = vld [vmem:[%s178 + $0x1f8] sm:$0xff]
        %v271 = vld [vmem:[%s178 + $0x200] sm:$0xff]
        %v272 = vld [vmem:[%s178 + $0x208] sm:$0xff]
        %v273 = vld [vmem:[%s178 + $0x210] sm:$0xff]
        %v274 = vld [vmem:[%s178 + $0x218] sm:$0xff]
        %v275 = vld [vmem:[%s178 + $0x220] sm:$0xff]
        %v276 = vld [vmem:[%s178 + $0x228] sm:$0xff]
        %v277 = vld [vmem:[%s178 + $0x230] sm:$0xff]
        %v278 = vld [vmem:[%s178 + $0x238] sm:$0xff]
        %v279 = vld [vmem:[%s178 + $0x240] sm:$0xff]
        %v280 = vld [vmem:[%s178 + $0x248] sm:$0xff]
        %v281 = vld [vmem:[%s178 + $0x250] sm:$0xff]
        %v282 = vld [vmem:[%s178 + $0x258] sm:$0xff]
        %v283 = vld [vmem:[%s178 + $0x260] sm:$0xff]
        %v284 = vld [vmem:[%s178 + $0x268] sm:$0xff]
        %v285 = vld [vmem:[%s178 + $0x270] sm:$0xff]
        %v286 = vld [vmem:[%s178 + $0x278] sm:$0xff]
        %v287 = vld [vmem:[%s178 + $0x280] sm:$0xff]
        %v288 = vld [vmem:[%s178 + $0x288] sm:$0xff]
        %v289 = vld [vmem:[%s178 + $0x290] sm:$0xff]
        %v290 = vld [vmem:[%s178 + $0x298] sm:$0xff]
        %v291 = vld [vmem:[%s178 + $0x2a0] sm:$0xff]
        %v292 = vld [vmem:[%s178 + $0x2a8] sm:$0xff]
        %v293 = vld [vmem:[%s178 + $0x2b0] sm:$0xff]
        %v294 = vld [vmem:[%s178 + $0x2b8] sm:$0xff]
        %v295 = vld [vmem:[%s178 + $0x2c0] sm:$0xff]
        %v296 = vld [vmem:[%s178 + $0x2c8] sm:$0xff]
        %v297 = vld [vmem:[%s178 + $0x2d0] sm:$0xff]
        %v298 = vld [vmem:[%s178 + $0x2d8] sm:$0xff]
        %v299 = vld [vmem:[%s178 + $0x2e0] sm:$0xff]
        %v300 = vld [vmem:[%s178 + $0x2e8] sm:$0xff]
        %v301 = vld [vmem:[%s178 + $0x2f0] sm:$0xff]
        %v302 = vld [vmem:[%s178 + $0x2f8] sm:$0xff]
        %v303 = vld [vmem:[%s178 + $0x300] sm:$0xff]
        %v304 = vld [vmem:[%s178 + $0x308] sm:$0xff]
        %v305 = vld [vmem:[%s178 + $0x310] sm:$0xff]
        %v306 = vld [vmem:[%s178 + $0x318] sm:$0xff]
        %v307 = vld [vmem:[%s178 + $0x320] sm:$0xff]
        %v308 = vld [vmem:[%s178 + $0x328] sm:$0xff]
        %v309 = vld [vmem:[%s178 + $0x330] sm:$0xff]
        %v310 = vld [vmem:[%s178 + $0x338] sm:$0xff]
        %v311 = vld [vmem:[%s178 + $0x340] sm:$0xff]
        %v312 = vld [vmem:[%s178 + $0x348] sm:$0xff]
        %v313 = vld [vmem:[%s178 + $0x350] sm:$0xff]
        %v314 = vld [vmem:[%s178 + $0x358] sm:$0xff]
        %v315 = vld [vmem:[%s178 + $0x360] sm:$0xff]
        %v316 = vld [vmem:[%s178 + $0x368] sm:$0xff]
        %v317 = vld [vmem:[%s178 + $0x370] sm:$0xff]
        %v318 = vld [vmem:[%s178 + $0x378] sm:$0xff]
        %v319 = vld [vmem:[%s178 + $0x380] sm:$0xff]
        %v320 = vld [vmem:[%s178 + $0x388] sm:$0xff]
        %v321 = vld [vmem:[%s178 + $0x390] sm:$0xff]
        %v322 = vld [vmem:[%s178 + $0x398] sm:$0xff]
        %v323 = vld [vmem:[%s178 + $0x3a0] sm:$0xff]
        %v324 = vld [vmem:[%s178 + $0x3a8] sm:$0xff]
        %v325 = vld [vmem:[%s178 + $0x3b0] sm:$0xff]
        %v326 = vld [vmem:[%s178 + $0x3b8] sm:$0xff]
        %v327 = vld [vmem:[%s178 + $0x3c0] sm:$0xff]
        %v328 = vld [vmem:[%s178 + $0x3c8] sm:$0xff]
        %v329 = vld [vmem:[%s178 + $0x3d0] sm:$0xff]
        %v330 = vld [vmem:[%s178 + $0x3d8] sm:$0xff]
        %v331 = vld [vmem:[%s178 + $0x3e0] sm:$0xff]
        %v332 = vld [vmem:[%s178 + $0x3e8] sm:$0xff]
        %v333 = vld [vmem:[%s178 + $0x3f0] sm:$0xff]
        %v334 = vld [vmem:[%s178 + $0x3f8] sm:$0xff]
        %v335 = vld [vmem:[%s178 + $0x400] sm:$0xff]
        %v336 = vld [vmem:[%s178 + $0x408] sm:$0xff]
        %v337 = vld [vmem:[%s178 + $0x410] sm:$0xff]
        %v338 = vld [vmem:[%s178 + $0x418] sm:$0xff]
        %v339 = vld [vmem:[%s178 + $0x420] sm:$0xff]
        %v340 = vld [vmem:[%s178 + $0x428] sm:$0xff]
        %v341 = vld [vmem:[%s178 + $0x430] sm:$0xff]
        %v342 = vld [vmem:[%s178 + $0x438] sm:$0xff]
        %v343 = vld [vmem:[%s178 + $0x440] sm:$0xff]
        %v344 = vld [vmem:[%s178 + $0x448] sm:$0xff]
        %v345 = vld [vmem:[%s178 + $0x450] sm:$0xff]
        %v346 = vld [vmem:[%s178 + $0x458] sm:$0xff]
        %v347 = vld [vmem:[%s178 + $0x460] sm:$0xff]
        %v348 = vld [vmem:[%s178 + $0x468] sm:$0xff]
        %v349 = vld [vmem:[%s178 + $0x470] sm:$0xff]
        %v350 = vld [vmem:[%s178 + $0x478] sm:$0xff]
        %v351 = vld [vmem:[%s178 + $0x480] sm:$0xff]
        %v352 = vld [vmem:[%s178 + $0x488] sm:$0xff]
        %v353 = vld [vmem:[%s178 + $0x490] sm:$0xff]
        %v354 = vld [vmem:[%s178 + $0x498] sm:$0xff]
        %v355 = vld [vmem:[%s178 + $0x4a0] sm:$0xff]
        %v356 = vld [vmem:[%s178 + $0x4a8] sm:$0xff]
        %v357 = vld [vmem:[%s178 + $0x4b0] sm:$0xff]
        %v358 = vld [vmem:[%s178 + $0x4b8] sm:$0xff]
        %v359 = vld [vmem:[%s178 + $0x4c0] sm:$0xff]
        %v360 = vld [vmem:[%s178 + $0x4c8] sm:$0xff]
        %v361 = vld [vmem:[%s178 + $0x4d0] sm:$0xff]
        %v362 = vld [vmem:[%s178 + $0x4d8] sm:$0xff]
        %v363 = vld [vmem:[%s178 + $0x4e0] sm:$0xff]
        %v364 = vld [vmem:[%s178 + $0x4e8] sm:$0xff]
        %v365 = vld [vmem:[%s178 + $0x4f0] sm:$0xff]
        %v366 = vld [vmem:[%s178 + $0x4f8] sm:$0xff]
        %v367 = vld [vmem:[%s178 + $0x500] sm:$0xff]
        %v368 = vld [vmem:[%s178 + $0x508] sm:$0xff]
        %v369 = vld [vmem:[%s178 + $0x510] sm:$0xff]
        %v370 = vld [vmem:[%s178 + $0x518] sm:$0xff]
        %v371 = vld [vmem:[%s178 + $0x520] sm:$0xff]
        %v372 = vld [vmem:[%s178 + $0x528] sm:$0xff]
        %v373 = vld [vmem:[%s178 + $0x530] sm:$0xff]
        %v374 = vld [vmem:[%s178 + $0x538] sm:$0xff]
        %v375 = vld [vmem:[%s178 + $0x540] sm:$0xff]
        %v376 = vld [vmem:[%s178 + $0x548] sm:$0xff]
        %v377 = vld [vmem:[%s178 + $0x550] sm:$0xff]
        %v378 = vld [vmem:[%s178 + $0x558] sm:$0xff]
        %v379 = vld [vmem:[%s178 + $0x560] sm:$0xff]
        %v380 = vld [vmem:[%s178 + $0x568] sm:$0xff]
        %v381 = vld [vmem:[%s178 + $0x570] sm:$0xff]
        %v382 = vld [vmem:[%s178 + $0x578] sm:$0xff]
        %v383 = vld [vmem:[%s178 + $0x580] sm:$0xff]
        %v384 = vld [vmem:[%s178 + $0x588] sm:$0xff]
        %v385 = vld [vmem:[%s178 + $0x590] sm:$0xff]
        %v386 = vld [vmem:[%s178 + $0x598] sm:$0xff]
        %v387 = vld [vmem:[%s178 + $0x5a0] sm:$0xff]
        %v388 = vld [vmem:[%s178 + $0x5a8] sm:$0xff]
        %v389 = vld [vmem:[%s178 + $0x5b0] sm:$0xff]
        %v390 = vld [vmem:[%s178 + $0x5b8] sm:$0xff]
        %v391 = vld [vmem:[%s178 + $0x5c0] sm:$0xff]
        %v392 = vld [vmem:[%s178 + $0x5c8] sm:$0xff]
        %v393 = vld [vmem:[%s178 + $0x5d0] sm:$0xff]
        %v394 = vld [vmem:[%s178 + $0x5d8] sm:$0xff]
        %v395 = vld [vmem:[%s178 + $0x5e0] sm:$0xff]
        %v396 = vld [vmem:[%s178 + $0x5e8] sm:$0xff]
        %v397 = vld [vmem:[%s178 + $0x5f0] sm:$0xff]
        %v398 = vld [vmem:[%s178 + $0x5f8] sm:$0xff]
        %v399 = vld [vmem:[%s2] sm:$0xff]
        %v400 = vld [vmem:[%s2 + $0x8] sm:$0xff]
        %v401 = vld [vmem:[%s2 + $0x10] sm:$0xff]
        %v402 = vld [vmem:[%s2 + $0x18] sm:$0xff]
        %v403 = vld [vmem:[%s2 + $0x20] sm:$0xff]
        %v404 = vld [vmem:[%s2 + $0x28] sm:$0xff]
        %v405 = vld [vmem:[%s2 + $0x30] sm:$0xff]
        %v406 = vld [vmem:[%s2 + $0x38] sm:$0xff]
        %v407 = vld [vmem:[%s2 + $0x40] sm:$0xff]
        %v408 = vld [vmem:[%s2 + $0x48] sm:$0xff]
        %v409 = vld [vmem:[%s2 + $0x50] sm:$0xff]
        %v410 = vld [vmem:[%s2 + $0x58] sm:$0xff]
        %v411 = vld [vmem:[%s2 + $0x60] sm:$0xff]
        %v412 = vld [vmem:[%s2 + $0x68] sm:$0xff]
        %v413 = vld [vmem:[%s2 + $0x70] sm:$0xff]
        %v414 = vld [vmem:[%s2 + $0x78] sm:$0xff]
        %v415 = vld [vmem:[%s2 + $0x80] sm:$0xff]
        %v416 = vld [vmem:[%s2 + $0x88] sm:$0xff]
        %v417 = vld [vmem:[%s2 + $0x90] sm:$0xff]
        %v418 = vld [vmem:[%s2 + $0x98] sm:$0xff]
        %v419 = vld [vmem:[%s2 + $0xa0] sm:$0xff]
        %v420 = vld [vmem:[%s2 + $0xa8] sm:$0xff]
        %v421 = vld [vmem:[%s2 + $0xb0] sm:$0xff]
        %v422 = vld [vmem:[%s2 + $0xb8] sm:$0xff]
        %v423 = vld [vmem:[%s2 + $0xc0] sm:$0xff]
        %v424 = vld [vmem:[%s2 + $0xc8] sm:$0xff]
        %v425 = vld [vmem:[%s2 + $0xd0] sm:$0xff]
        %v426 = vld [vmem:[%s2 + $0xd8] sm:$0xff]
        %v427 = vld [vmem:[%s2 + $0xe0] sm:$0xff]
        %v428 = vld [vmem:[%s2 + $0xe8] sm:$0xff]
        %v429 = vld [vmem:[%s2 + $0xf0] sm:$0xff]
        %v430 = vld [vmem:[%s2 + $0xf8] sm:$0xff]
        %431 = vmatprep.subr.mxu0 0.0
        %432 = vmatpush1.msra.mxu0 %v399
        %433 = vmatprep.subr.mxu0 0.0
        %434 = vmatpush1.msra.mxu0 %v400
        %435 = vmatprep.subr.mxu0 0.0
        %436 = vmatpush1.msra.mxu0 %v401
        %437 = vmatprep.subr.mxu0 0.0
        %438 = vmatpush1.msra.mxu0 %v402
        %439 = vmatprep.subr.mxu0 0.0
        %440 = vmatpush1.msra.mxu0 %v403
        %441 = vmatprep.subr.mxu0 0.0
        %442 = vmatpush1.msra.mxu0 %v404
        %443 = vmatprep.subr.mxu0 0.0
        %444 = vmatpush1.msra.mxu0 %v405
        %445 = vmatprep.subr.mxu0 0.0
        %446 = vmatpush1.msra.mxu0 %v406
        %447 = vmatprep.subr.mxu0 0.0
        %448 = vmatpush1.msra.mxu0 %v407
        %449 = vmatprep.subr.mxu0 0.0
        %450 = vmatpush1.msra.mxu0 %v408
        %451 = vmatprep.subr.mxu0 0.0
        %452 = vmatpush1.msra.mxu0 %v409
        %453 = vmatprep.subr.mxu0 0.0
        %454 = vmatpush1.msra.mxu0 %v410
        %455 = vmatprep.subr.mxu0 0.0
        %456 = vmatpush1.msra.mxu0 %v411
        %457 = vmatprep.subr.mxu0 0.0
        %458 = vmatpush1.msra.mxu0 %v412
        %459 = vmatprep.subr.mxu0 0.0
        %460 = vmatpush1.msra.mxu0 %v413
        %461 = vmatprep.subr.mxu0 0.0
        %462 = vmatpush1.msra.mxu0 %v414
        %463 = vmatprep.subr.mxu0 0.0
        %464 = vmatpush1.msra.mxu0 %v415
        %465 = vmatprep.subr.mxu0 0.0
        %466 = vmatpush1.msra.mxu0 %v416
        %467 = vmatprep.subr.mxu0 0.0
        %468 = vmatpush1.msra.mxu0 %v417
        %469 = vmatprep.subr.mxu0 0.0
        %470 = vmatpush1.msra.mxu0 %v418
        %471 = vmatprep.subr.mxu0 0.0
        %472 = vmatpush1.msra.mxu0 %v419
        %473 = vmatprep.subr.mxu0 0.0
        %474 = vmatpush1.msra.mxu0 %v420
        %475 = vmatprep.subr.mxu0 0.0
        %476 = vmatpush1.msra.mxu0 %v421
        %477 = vmatprep.subr.mxu0 0.0
        %478 = vmatpush1.msra.mxu0 %v422
        %479 = vmatprep.subr.mxu0 0.0
        %480 = vmatpush1.msra.mxu0 %v423
        %481 = vmatprep.subr.mxu0 0.0
        %482 = vmatpush1.msra.mxu0 %v424
        %483 = vmatprep.subr.mxu0 0.0
        %484 = vmatpush1.msra.mxu0 %v425
        %485 = vmatprep.subr.mxu0 0.0
        %486 = vmatpush1.msra.mxu0 %v426
        %487 = vmatprep.subr.mxu0 0.0
        %488 = vmatpush1.msra.mxu0 %v427
        %489 = vmatprep.subr.mxu0 0.0
        %490 = vmatpush1.msra.mxu0 %v428
        %491 = vmatprep.subr.mxu0 0.0
        %492 = vmatpush1.msra.mxu0 %v429
        %493 = vmatprep.subr.mxu0 0.0
        %494 = vmatpush1.msra.mxu0 %v430
        %495 = vmatprep.mubr.f32.mxu0 %v208
        %496 = vmatmul.mubr.f32.gmra.mrb[0].mxu0 %v207
        %v497 = vpop.f32.mrb[0].mxu0
        %v498 = vadd.f32 0.0, %v497
        %v499 = vpop.f32.mrb[0].mxu0
        %500 = vmatprep.mubr.f32.mxu0 %v210
        %501 = vmatmul.mubr.f32.gmra.mrb[0].mxu0 %v209
        %v502 = vpop.f32.mrb[0].mxu0
        %v503 = vadd.f32 0.0, %v502
        %v504 = vpop.f32.mrb[0].mxu0
        %505 = vmatprep.mubr.f32.mxu0 %v212
        %506 = vmatmul.mubr.f32.gmra.mrb[0].mxu0 %v211
        %v507 = vpop.f32.mrb[0].mxu0
        %v508 = vadd.f32 0.0, %v507
        %v509 = vpop.f32.mrb[0].mxu0
        %510 = vmatprep.mubr.f32.mxu0 %v214
        %511 = vmatmul.mubr.f32.gmra.mrb[0].mxu0 %v213
        %v512 = vpop.f32.mrb[0].mxu0
        %v513 = vadd.f32 0.0, %v512
        %v514 = vpop.f32.mrb[0].mxu0
        %515 = vmatprep.mubr.f32.mxu0 %v216
        %516 = vmatmul.mubr.f32.gmra.mrb[0].mxu0 %v215
        %v517 = vpop.f32.mrb[0].mxu0
        %v518 = vadd.f32 0.0, %v517
        %v519 = vpop.f32.mrb[0].mxu0
        %520 = vmatprep.mubr.f32.mxu0 %v218
        %521 = vmatmul.mubr.f32.gmra.mrb[0].mxu0 %v217
        %v522 = vpop.f32.mrb[0].mxu0
        %v523 = vadd.f32 0.0, %v522
        %v524 = vpop.f32.mrb[0].mxu0
        %525 = vmatprep.mubr.f32.mxu0 %v220
        %526 = vmatmul.mubr.f32.gmra.mrb[0].mxu0 %v219
        %v527 = vpop.f32.mrb[0].mxu0
        %v528 = vadd.f32 0.0, %v527
        %v529 = vpop.f32.mrb[0].mxu0
        %530 = vmatprep.mubr.f32.mxu0 %v222
        %531 = vmatmul.mubr.f32.gmra.mrb[0].mxu0 %v221
        %v532 = vpop.f32.mrb[0].mxu0
        %v533 = vadd.f32 0.0, %v532
        %v534 = vpop.f32.mrb[0].mxu0
        %535 = vmatprep.mubr.f32.mxu0 %v224
        %536 = vmatmul.mubr.f32.gmra.mrb[0].mxu0 %v223
        %v537 = vpop.f32.mrb[0].mxu0
        %v538 = vadd.f32 0.0, %v537
        %v539 = vpop.f32.mrb[0].mxu0
        %540 = vmatprep.mubr.f32.mxu0 %v226
        %541 = vmatmul.mubr.f32.gmra.mrb[0].mxu0 %v225
        %v542 = vpop.f32.mrb[0].mxu0
        %v543 = vadd.f32 0.0, %v542
        %v544 = vpop.f32.mrb[0].mxu0
        %545 = vmatprep.mubr.f32.mxu0 %v228
        %546 = vmatmul.mubr.f32.gmra.mrb[0].mxu0 %v227
        %v547 = vpop.f32.mrb[0].mxu0
        %v548 = vadd.f32 0.0, %v547
        %v549 = vpop.f32.mrb[0].mxu0
        %550 = vmatprep.mubr.f32.mxu0 %v230
        %551 = vmatmul.mubr.f32.gmra.mrb[0].mxu0 %v229
        %v552 = vpop.f32.mrb[0].mxu0
        %v553 = vadd.f32 0.0, %v552
        %v554 = vpop.f32.mrb[0].mxu0
        %555 = vmatprep.mubr.f32.mxu0 %v232
        %556 = vmatmul.mubr.f32.gmra.mrb[0].mxu0 %v231
        %v557 = vpop.f32.mrb[0].mxu0
        %v558 = vadd.f32 0.0, %v557
        %v559 = vpop.f32.mrb[0].mxu0
        %560 = vmatprep.mubr.f32.mxu0 %v234
        %561 = vmatmul.mubr.f32.gmra.mrb[0].mxu0 %v233
        %v562 = vpop.f32.mrb[0].mxu0
        %v563 = vadd.f32 0.0, %v562
        %v564 = vpop.f32.mrb[0].mxu0
        %565 = vmatprep.mubr.f32.mxu0 %v236
        %566 = vmatmul.mubr.f32.gmra.mrb[0].mxu0 %v235
        %v567 = vpop.f32.mrb[0].mxu0
        %v568 = vadd.f32 0.0, %v567
        %v569 = vpop.f32.mrb[0].mxu0
        %570 = vmatprep.mubr.f32.mxu0 %v238
        %571 = vmatmul.mubr.f32.gmra.mrb[0].mxu0 %v237
        %v572 = vpop.f32.mrb[0].mxu0
        %v573 = vadd.f32 0.0, %v572
        %v574 = vpop.f32.mrb[0].mxu0
        %575 = vmatprep.mubr.f32.mxu0 %v240
        %576 = vmatmul.mubr.f32.gmra.mrb[0].mxu0 %v239
        %v577 = vpop.f32.mrb[0].mxu0
        %v578 = vadd.f32 0.0, %v577
        %v579 = vpop.f32.mrb[0].mxu0
        %580 = vmatprep.mubr.f32.mxu0 %v242
        %581 = vmatmul.mubr.f32.gmra.mrb[0].mxu0 %v241
        %v582 = vpop.f32.mrb[0].mxu0
        %v583 = vadd.f32 0.0, %v582
        %v584 = vpop.f32.mrb[0].mxu0
        %585 = vmatprep.mubr.f32.mxu0 %v244
        %586 = vmatmul.mubr.f32.gmra.mrb[0].mxu0 %v243
        %v587 = vpop.f32.mrb[0].mxu0
        %v588 = vadd.f32 0.0, %v587
        %v589 = vpop.f32.mrb[0].mxu0
        %590 = vmatprep.mubr.f32.mxu0 %v246
        %591 = vmatmul.mubr.f32.gmra.mrb[0].mxu0 %v245
        %v592 = vpop.f32.mrb[0].mxu0
        %v593 = vadd.f32 0.0, %v592
        %v594 = vpop.f32.mrb[0].mxu0
        %595 = vmatprep.mubr.f32.mxu0 %v248
        %596 = vmatmul.mubr.f32.gmra.mrb[0].mxu0 %v247
        %v597 = vpop.f32.mrb[0].mxu0
        %v598 = vadd.f32 0.0, %v597
        %v599 = vpop.f32.mrb[0].mxu0
        %600 = vmatprep.mubr.f32.mxu0 %v250
        %601 = vmatmul.mubr.f32.gmra.mrb[0].mxu0 %v249
        %v602 = vpop.f32.mrb[0].mxu0
        %v603 = vadd.f32 0.0, %v602
        %v604 = vpop.f32.mrb[0].mxu0
        %605 = vmatprep.mubr.f32.mxu0 %v252
        %606 = vmatmul.mubr.f32.gmra.mrb[0].mxu0 %v251
        %v607 = vpop.f32.mrb[0].mxu0
        %v608 = vadd.f32 0.0, %v607
        %v609 = vpop.f32.mrb[0].mxu0
        %610 = vmatprep.mubr.f32.mxu0 %v254
        %611 = vmatmul.mubr.f32.gmra.mrb[0].mxu0 %v253
        %v612 = vpop.f32.mrb[0].mxu0
        %v613 = vadd.f32 0.0, %v612
        %v614 = vpop.f32.mrb[0].mxu0
        %615 = vmatprep.mubr.f32.mxu0 %v256
        %616 = vmatmul.mubr.f32.gmra.mrb[0].mxu0 %v255
        %v617 = vpop.f32.mrb[0].mxu0
        %v618 = vadd.f32 0.0, %v617
        %v619 = vpop.f32.mrb[0].mxu0
        %620 = vmatprep.mubr.f32.mxu0 %v258
        %621 = vmatmul.mubr.f32.gmra.mrb[0].mxu0 %v257
        %v622 = vpop.f32.mrb[0].mxu0
        %v623 = vadd.f32 0.0, %v622
        %v624 = vpop.f32.mrb[0].mxu0
        %625 = vmatprep.mubr.f32.mxu0 %v260
        %626 = vmatmul.mubr.f32.gmra.mrb[0].mxu0 %v259
        %v627 = vpop.f32.mrb[0].mxu0
        %v628 = vadd.f32 0.0, %v627
        %v629 = vpop.f32.mrb[0].mxu0
        %630 = vmatprep.mubr.f32.mxu0 %v262
        %631 = vmatmul.mubr.f32.gmra.mrb[0].mxu0 %v261
        %v632 = vpop.f32.mrb[0].mxu0
        %v633 = vadd.f32 0.0, %v632
        %v634 = vpop.f32.mrb[0].mxu0
        %635 = vmatprep.mubr.f32.mxu0 %v264
        %636 = vmatmul.mubr.f32.gmra.mrb[0].mxu0 %v263
        %v637 = vpop.f32.mrb[0].mxu0
        %v638 = vadd.f32 0.0, %v637
        %v639 = vpop.f32.mrb[0].mxu0
        %640 = vmatprep.mubr.f32.mxu0 %v266
        %641 = vmatmul.mubr.f32.gmra.mrb[0].mxu0 %v265
        %v642 = vpop.f32.mrb[0].mxu0
        %v643 = vadd.f32 0.0, %v642
        %v644 = vpop.f32.mrb[0].mxu0
        %645 = vmatprep.mubr.f32.mxu0 %v268
        %646 = vmatmul.mubr.f32.gmra.mrb[0].mxu0 %v267
        %v647 = vpop.f32.mrb[0].mxu0
        %v648 = vadd.f32 0.0, %v647
        %v649 = vpop.f32.mrb[0].mxu0
        %650 = vmatprep.mubr.f32.mxu0 %v270
        %651 = vmatmul.mubr.f32.gmra.mrb[0].mxu0 %v269
        %v652 = vpop.f32.mrb[0].mxu0
        %v653 = vadd.f32 0.0, %v652
        %v654 = vpop.f32.mrb[0].mxu0
        %655 = vmatprep.mubr.f32.mxu0 %v272
        %656 = vmatmul.mubr.f32.gmra.mrb[0].mxu0 %v271
        %v657 = vpop.f32.mrb[0].mxu0
        %v658 = vadd.f32 0.0, %v657
        %v659 = vpop.f32.mrb[0].mxu0
        %660 = vmatprep.mubr.f32.mxu0 %v274
        %661 = vmatmul.mubr.f32.gmra.mrb[0].mxu0 %v273
        %v662 = vpop.f32.mrb[0].mxu0
        %v663 = vadd.f32 0.0, %v662
        %v664 = vpop.f32.mrb[0].mxu0
        %665 = vmatprep.mubr.f32.mxu0 %v276
        %666 = vmatmul.mubr.f32.gmra.mrb[0].mxu0 %v275
        %v667 = vpop.f32.mrb[0].mxu0
        %v668 = vadd.f32 0.0, %v667
        %v669 = vpop.f32.mrb[0].mxu0
        %670 = vmatprep.mubr.f32.mxu0 %v278
        %671 = vmatmul.mubr.f32.gmra.mrb[0].mxu0 %v277
        %v672 = vpop.f32.mrb[0].mxu0
        %v673 = vadd.f32 0.0, %v672
        %v674 = vpop.f32.mrb[0].mxu0
        %675 = vmatprep.mubr.f32.mxu0 %v280
        %676 = vmatmul.mubr.f32.gmra.mrb[0].mxu0 %v279
        %v677 = vpop.f32.mrb[0].mxu0
        %v678 = vadd.f32 0.0, %v677
        %v679 = vpop.f32.mrb[0].mxu0
        %680 = vmatprep.mubr.f32.mxu0 %v282
        %681 = vmatmul.mubr.f32.gmra.mrb[0].mxu0 %v281
        %v682 = vpop.f32.mrb[0].mxu0
        %v683 = vadd.f32 0.0, %v682
        %v684 = vpop.f32.mrb[0].mxu0
        %685 = vmatprep.mubr.f32.mxu0 %v284
        %686 = vmatmul.mubr.f32.gmra.mrb[0].mxu0 %v283
        %v687 = vpop.f32.mrb[0].mxu0
        %v688 = vadd.f32 0.0, %v687
        %v689 = vpop.f32.mrb[0].mxu0
        %690 = vmatprep.mubr.f32.mxu0 %v286
        %691 = vmatmul.mubr.f32.gmra.mrb[0].mxu0 %v285
        %v692 = vpop.f32.mrb[0].mxu0
        %v693 = vadd.f32 0.0, %v692
        %v694 = vpop.f32.mrb[0].mxu0
        %695 = vmatprep.mubr.f32.mxu0 %v288
        %696 = vmatmul.mubr.f32.gmra.mrb[0].mxu0 %v287
        %v697 = vpop.f32.mrb[0].mxu0
        %v698 = vadd.f32 0.0, %v697
        %v699 = vpop.f32.mrb[0].mxu0
        %700 = vmatprep.mubr.f32.mxu0 %v290
        %701 = vmatmul.mubr.f32.gmra.mrb[0].mxu0 %v289
        %v702 = vpop.f32.mrb[0].mxu0
        %v703 = vadd.f32 0.0, %v702
        %v704 = vpop.f32.mrb[0].mxu0
        %705 = vmatprep.mubr.f32.mxu0 %v292
        %706 = vmatmul.mubr.f32.gmra.mrb[0].mxu0 %v291
        %v707 = vpop.f32.mrb[0].mxu0
        %v708 = vadd.f32 0.0, %v707
        %v709 = vpop.f32.mrb[0].mxu0
        %710 = vmatprep.mubr.f32.mxu0 %v294
        %711 = vmatmul.mubr.f32.gmra.mrb[0].mxu0 %v293
        %v712 = vpop.f32.mrb[0].mxu0
        %v713 = vadd.f32 0.0, %v712
        %v714 = vpop.f32.mrb[0].mxu0
        %715 = vmatprep.mubr.f32.mxu0 %v296
        %716 = vmatmul.mubr.f32.gmra.mrb[0].mxu0 %v295
        %v717 = vpop.f32.mrb[0].mxu0
        %v718 = vadd.f32 0.0, %v717
        %v719 = vpop.f32.mrb[0].mxu0
        %720 = vmatprep.mubr.f32.mxu0 %v298
        %721 = vmatmul.mubr.f32.gmra.mrb[0].mxu0 %v297
        %v722 = vpop.f32.mrb[0].mxu0
        %v723 = vadd.f32 0.0, %v722
        %v724 = vpop.f32.mrb[0].mxu0
        %725 = vmatprep.mubr.f32.mxu0 %v300
        %726 = vmatmul.mubr.f32.gmra.mrb[0].mxu0 %v299
        %v727 = vpop.f32.mrb[0].mxu0
        %v728 = vadd.f32 0.0, %v727
        %v729 = vpop.f32.mrb[0].mxu0
        %730 = vmatprep.mubr.f32.mxu0 %v302
        %731 = vmatmul.mubr.f32.gmra.mrb[0].mxu0 %v301
        %v732 = vpop.f32.mrb[0].mxu0
        %v733 = vadd.f32 0.0, %v732
        %v734 = vpop.f32.mrb[0].mxu0
        %735 = vmatprep.mubr.f32.mxu0 %v304
        %736 = vmatmul.mubr.f32.gmra.mrb[0].mxu0 %v303
        %v737 = vpop.f32.mrb[0].mxu0
        %v738 = vadd.f32 0.0, %v737
        %v739 = vpop.f32.mrb[0].mxu0
        %740 = vmatprep.mubr.f32.mxu0 %v306
        %741 = vmatmul.mubr.f32.gmra.mrb[0].mxu0 %v305
        %v742 = vpop.f32.mrb[0].mxu0
        %v743 = vadd.f32 0.0, %v742
        %v744 = vpop.f32.mrb[0].mxu0
        %745 = vmatprep.mubr.f32.mxu0 %v308
        %746 = vmatmul.mubr.f32.gmra.mrb[0].mxu0 %v307
        %v747 = vpop.f32.mrb[0].mxu0
        %v748 = vadd.f32 0.0, %v747
        %v749 = vpop.f32.mrb[0].mxu0
        %750 = vmatprep.mubr.f32.mxu0 %v310
        %751 = vmatmul.mubr.f32.gmra.mrb[0].mxu0 %v309
        %v752 = vpop.f32.mrb[0].mxu0
        %v753 = vadd.f32 0.0, %v752
        %v754 = vpop.f32.mrb[0].mxu0
        %755 = vmatprep.mubr.f32.mxu0 %v312
        %756 = vmatmul.mubr.f32.gmra.mrb[0].mxu0 %v311
        %v757 = vpop.f32.mrb[0].mxu0
        %v758 = vadd.f32 0.0, %v757
        %v759 = vpop.f32.mrb[0].mxu0
        %760 = vmatprep.mubr.f32.mxu0 %v314
        %761 = vmatmul.mubr.f32.gmra.mrb[0].mxu0 %v313
        %v762 = vpop.f32.mrb[0].mxu0
        %v763 = vadd.f32 0.0, %v762
        %v764 = vpop.f32.mrb[0].mxu0
        %765 = vmatprep.mubr.f32.mxu0 %v316
        %766 = vmatmul.mubr.f32.gmra.mrb[0].mxu0 %v315
        %v767 = vpop.f32.mrb[0].mxu0
        %v768 = vadd.f32 0.0, %v767
        %v769 = vpop.f32.mrb[0].mxu0
        %770 = vmatprep.mubr.f32.mxu0 %v318
        %771 = vmatmul.mubr.f32.gmra.mrb[0].mxu0 %v317
        %v772 = vpop.f32.mrb[0].mxu0
        %v773 = vadd.f32 0.0, %v772
        %v774 = vpop.f32.mrb[0].mxu0
        %775 = vmatprep.mubr.f32.mxu0 %v320
        %776 = vmatmul.mubr.f32.gmra.mrb[0].mxu0 %v319
        %v777 = vpop.f32.mrb[0].mxu0
        %v778 = vadd.f32 0.0, %v777
        %v779 = vpop.f32.mrb[0].mxu0
        %780 = vmatprep.mubr.f32.mxu0 %v322
        %781 = vmatmul.mubr.f32.gmra.mrb[0].mxu0 %v321
        %v782 = vpop.f32.mrb[0].mxu0
        %v783 = vadd.f32 0.0, %v782
        %v784 = vpop.f32.mrb[0].mxu0
        %785 = vmatprep.mubr.f32.mxu0 %v324
        %786 = vmatmul.mubr.f32.gmra.mrb[0].mxu0 %v323
        %v787 = vpop.f32.mrb[0].mxu0
        %v788 = vadd.f32 0.0, %v787
        %v789 = vpop.f32.mrb[0].mxu0
        %790 = vmatprep.mubr.f32.mxu0 %v326
        %791 = vmatmul.mubr.f32.gmra.mrb[0].mxu0 %v325
        %v792 = vpop.f32.mrb[0].mxu0
        %v793 = vadd.f32 0.0, %v792
        %v794 = vpop.f32.mrb[0].mxu0
        %795 = vmatprep.mubr.f32.mxu0 %v328
        %796 = vmatmul.mubr.f32.gmra.mrb[0].mxu0 %v327
        %v797 = vpop.f32.mrb[0].mxu0
        %v798 = vadd.f32 0.0, %v797
        %v799 = vpop.f32.mrb[0].mxu0
        %800 = vmatprep.mubr.f32.mxu0 %v330
        %801 = vmatmul.mubr.f32.gmra.mrb[0].mxu0 %v329
        %v802 = vpop.f32.mrb[0].mxu0
        %v803 = vadd.f32 0.0, %v802
        %v804 = vpop.f32.mrb[0].mxu0
        %805 = vmatprep.mubr.f32.mxu0 %v332
        %806 = vmatmul.mubr.f32.gmra.mrb[0].mxu0 %v331
        %v807 = vpop.f32.mrb[0].mxu0
        %v808 = vadd.f32 0.0, %v807
        %v809 = vpop.f32.mrb[0].mxu0
        %810 = vmatprep.mubr.f32.mxu0 %v334
        %811 = vmatmul.mubr.f32.gmra.mrb[0].mxu0 %v333
        %v812 = vpop.f32.mrb[0].mxu0
        %v813 = vadd.f32 0.0, %v812
        %v814 = vpop.f32.mrb[0].mxu0
        %815 = vmatprep.mubr.f32.mxu0 %v336
        %816 = vmatmul.mubr.f32.gmra.mrb[0].mxu0 %v335
        %v817 = vpop.f32.mrb[0].mxu0
        %v818 = vadd.f32 0.0, %v817
        %v819 = vpop.f32.mrb[0].mxu0
        %820 = vmatprep.mubr.f32.mxu0 %v338
        %821 = vmatmul.mubr.f32.gmra.mrb[0].mxu0 %v337
        %v822 = vpop.f32.mrb[0].mxu0
        %v823 = vadd.f32 0.0, %v822
        %v824 = vpop.f32.mrb[0].mxu0
        %825 = vmatprep.mubr.f32.mxu0 %v340
        %826 = vmatmul.mubr.f32.gmra.mrb[0].mxu0 %v339
        %v827 = vpop.f32.mrb[0].mxu0
        %v828 = vadd.f32 0.0, %v827
        %v829 = vpop.f32.mrb[0].mxu0
        %830 = vmatprep.mubr.f32.mxu0 %v342
        %831 = vmatmul.mubr.f32.gmra.mrb[0].mxu0 %v341
        %v832 = vpop.f32.mrb[0].mxu0
        %v833 = vadd.f32 0.0, %v832
        %v834 = vpop.f32.mrb[0].mxu0
        %835 = vmatprep.mubr.f32.mxu0 %v344
        %836 = vmatmul.mubr.f32.gmra.mrb[0].mxu0 %v343
        %v837 = vpop.f32.mrb[0].mxu0
        %v838 = vadd.f32 0.0, %v837
        %v839 = vpop.f32.mrb[0].mxu0
        %840 = vmatprep.mubr.f32.mxu0 %v346
        %841 = vmatmul.mubr.f32.gmra.mrb[0].mxu0 %v345
        %v842 = vpop.f32.mrb[0].mxu0
        %v843 = vadd.f32 0.0, %v842
        %v844 = vpop.f32.mrb[0].mxu0
        %845 = vmatprep.mubr.f32.mxu0 %v348
        %846 = vmatmul.mubr.f32.gmra.mrb[0].mxu0 %v347
        %v847 = vpop.f32.mrb[0].mxu0
        %v848 = vadd.f32 0.0, %v847
        %v849 = vpop.f32.mrb[0].mxu0
        %850 = vmatprep.mubr.f32.mxu0 %v350
        %851 = vmatmul.mubr.f32.gmra.mrb[0].mxu0 %v349
        %v852 = vpop.f32.mrb[0].mxu0
        %v853 = vadd.f32 0.0, %v852
        %v854 = vpop.f32.mrb[0].mxu0
        %855 = vmatprep.mubr.f32.mxu0 %v352
        %856 = vmatmul.mubr.f32.gmra.mrb[0].mxu0 %v351
        %v857 = vpop.f32.mrb[0].mxu0
        %v858 = vadd.f32 0.0, %v857
        %v859 = vpop.f32.mrb[0].mxu0
        %860 = vmatprep.mubr.f32.mxu0 %v354
        %861 = vmatmul.mubr.f32.gmra.mrb[0].mxu0 %v353
        %v862 = vpop.f32.mrb[0].mxu0
        %v863 = vadd.f32 0.0, %v862
        %v864 = vpop.f32.mrb[0].mxu0
        %865 = vmatprep.mubr.f32.mxu0 %v356
        %866 = vmatmul.mubr.f32.gmra.mrb[0].mxu0 %v355
        %v867 = vpop.f32.mrb[0].mxu0
        %v868 = vadd.f32 0.0, %v867
        %v869 = vpop.f32.mrb[0].mxu0
        %870 = vmatprep.mubr.f32.mxu0 %v358
        %871 = vmatmul.mubr.f32.gmra.mrb[0].mxu0 %v357
        %v872 = vpop.f32.mrb[0].mxu0
        %v873 = vadd.f32 0.0, %v872
        %v874 = vpop.f32.mrb[0].mxu0
        %875 = vmatprep.mubr.f32.mxu0 %v360
        %876 = vmatmul.mubr.f32.gmra.mrb[0].mxu0 %v359
        %v877 = vpop.f32.mrb[0].mxu0
        %v878 = vadd.f32 0.0, %v877
        %v879 = vpop.f32.mrb[0].mxu0
        %880 = vmatprep.mubr.f32.mxu0 %v362
        %881 = vmatmul.mubr.f32.gmra.mrb[0].mxu0 %v361
        %v882 = vpop.f32.mrb[0].mxu0
        %v883 = vadd.f32 0.0, %v882
        %v884 = vpop.f32.mrb[0].mxu0
        %885 = vmatprep.mubr.f32.mxu0 %v364
        %886 = vmatmul.mubr.f32.gmra.mrb[0].mxu0 %v363
        %v887 = vpop.f32.mrb[0].mxu0
        %v888 = vadd.f32 0.0, %v887
        %v889 = vpop.f32.mrb[0].mxu0
        %890 = vmatprep.mubr.f32.mxu0 %v366
        %891 = vmatmul.mubr.f32.gmra.mrb[0].mxu0 %v365
        %v892 = vpop.f32.mrb[0].mxu0
        %v893 = vadd.f32 0.0, %v892
        %v894 = vpop.f32.mrb[0].mxu0
        %895 = vmatprep.mubr.f32.mxu0 %v368
        %896 = vmatmul.mubr.f32.gmra.mrb[0].mxu0 %v367
        %v897 = vpop.f32.mrb[0].mxu0
        %v898 = vadd.f32 0.0, %v897
        %v899 = vpop.f32.mrb[0].mxu0
        %900 = vmatprep.mubr.f32.mxu0 %v370
        %901 = vmatmul.mubr.f32.gmra.mrb[0].mxu0 %v369
        %v902 = vpop.f32.mrb[0].mxu0
        %v903 = vadd.f32 0.0, %v902
        %v904 = vpop.f32.mrb[0].mxu0
        %905 = vmatprep.mubr.f32.mxu0 %v372
        %906 = vmatmul.mubr.f32.gmra.mrb[0].mxu0 %v371
        %v907 = vpop.f32.mrb[0].mxu0
        %v908 = vadd.f32 0.0, %v907
        %v909 = vpop.f32.mrb[0].mxu0
        %910 = vmatprep.mubr.f32.mxu0 %v374
        %911 = vmatmul.mubr.f32.gmra.mrb[0].mxu0 %v373
        %v912 = vpop.f32.mrb[0].mxu0
        %v913 = vadd.f32 0.0, %v912
        %v914 = vpop.f32.mrb[0].mxu0
        %915 = vmatprep.mubr.f32.mxu0 %v376
        %916 = vmatmul.mubr.f32.gmra.mrb[0].mxu0 %v375
        %v917 = vpop.f32.mrb[0].mxu0
        %v918 = vadd.f32 0.0, %v917
        %v919 = vpop.f32.mrb[0].mxu0
        %920 = vmatprep.mubr.f32.mxu0 %v378
        %921 = vmatmul.mubr.f32.gmra.mrb[0].mxu0 %v377
        %v922 = vpop.f32.mrb[0].mxu0
        %v923 = vadd.f32 0.0, %v922
        %v924 = vpop.f32.mrb[0].mxu0
        %925 = vmatprep.mubr.f32.mxu0 %v380
        %926 = vmatmul.mubr.f32.gmra.mrb[0].mxu0 %v379
        %v927 = vpop.f32.mrb[0].mxu0
        %v928 = vadd.f32 0.0, %v927
        %v929 = vpop.f32.mrb[0].mxu0
        %930 = vmatprep.mubr.f32.mxu0 %v382
        %931 = vmatmul.mubr.f32.gmra.mrb[0].mxu0 %v381
        %v932 = vpop.f32.mrb[0].mxu0
        %v933 = vadd.f32 0.0, %v932
        %v934 = vpop.f32.mrb[0].mxu0
        %935 = vmatprep.mubr.f32.mxu0 %v384
        %936 = vmatmul.mubr.f32.gmra.mrb[0].mxu0 %v383
        %v937 = vpop.f32.mrb[0].mxu0
        %v938 = vadd.f32 0.0, %v937
        %v939 = vpop.f32.mrb[0].mxu0
        %940 = vmatprep.mubr.f32.mxu0 %v386
        %941 = vmatmul.mubr.f32.gmra.mrb[0].mxu0 %v385
        %v942 = vpop.f32.mrb[0].mxu0
        %v943 = vadd.f32 0.0, %v942
        %v944 = vpop.f32.mrb[0].mxu0
        %945 = vmatprep.mubr.f32.mxu0 %v388
        %946 = vmatmul.mubr.f32.gmra.mrb[0].mxu0 %v387
        %v947 = vpop.f32.mrb[0].mxu0
        %v948 = vadd.f32 0.0, %v947
        %v949 = vpop.f32.mrb[0].mxu0
        %950 = vmatprep.mubr.f32.mxu0 %v390
        %951 = vmatmul.mubr.f32.gmra.mrb[0].mxu0 %v389
        %v952 = vpop.f32.mrb[0].mxu0
        %v953 = vadd.f32 0.0, %v952
        %v954 = vpop.f32.mrb[0].mxu0
        %955 = vmatprep.mubr.f32.mxu0 %v392
        %956 = vmatmul.mubr.f32.gmra.mrb[0].mxu0 %v391
        %v957 = vpop.f32.mrb[0].mxu0
        %v958 = vadd.f32 0.0, %v957
        %v959 = vpop.f32.mrb[0].mxu0
        %960 = vmatprep.mubr.f32.mxu0 %v394
        %961 = vmatmul.mubr.f32.gmra.mrb[0].mxu0 %v393
        %v962 = vpop.f32.mrb[0].mxu0
        %v963 = vadd.f32 0.0, %v962
        %v964 = vpop.f32.mrb[0].mxu0
        %965 = vmatprep.mubr.f32.mxu0 %v396
        %966 = vmatmul.mubr.f32.gmra.mrb[0].mxu0 %v395
        %v967 = vpop.f32.mrb[0].mxu0
        %v968 = vadd.f32 0.0, %v967
        %v969 = vpop.f32.mrb[0].mxu0
        %970 = vmatprep.mubr.f32.mxu0 %v398
        %971 = vmatmul.mubr.f32.gmra.mrb[0].mxu0 %v397
        %v972 = vpop.f32.mrb[0].mxu0
        %v973 = vadd.f32 0.0, %v972
        %v974 = vpop.f32.mrb[0].mxu0
        %975 = vdwg.mxu0
        %v976 = vld [vmem:[#allocation5] sm:$0xff]
        %v977 = vld [vmem:[#allocation5 + $0x8] sm:$0xff]
        %v978 = vld [vmem:[#allocation5 + $0x10] sm:$0xff]
        %v979 = vld [vmem:[#allocation5 + $0x18] sm:$0xff]
        %v980 = vld [vmem:[#allocation5 + $0x20] sm:$0xff]
        %v981 = vld [vmem:[#allocation5 + $0x28] sm:$0xff]
        %v982 = vld [vmem:[#allocation5 + $0x30] sm:$0xff]
        %v983 = vld [vmem:[#allocation5 + $0x38] sm:$0xff]
        %v984 = vld [vmem:[#allocation5 + $0x40] sm:$0xff]
        %v985 = vld [vmem:[#allocation5 + $0x48] sm:$0xff]
        %v986 = vld [vmem:[#allocation5 + $0x50] sm:$0xff]
        %v987 = vld [vmem:[#allocation5 + $0x58] sm:$0xff]
        %v988 = vld [vmem:[#allocation5 + $0x60] sm:$0xff]
        %v989 = vld [vmem:[#allocation5 + $0x68] sm:$0xff]
        %v990 = vld [vmem:[#allocation5 + $0x70] sm:$0xff]
        %v991 = vld [vmem:[#allocation5 + $0x78] sm:$0xff]
        %v992 = vld [vmem:[#allocation5 + $0x80] sm:$0xff]
        %v993 = vld [vmem:[#allocation5 + $0x88] sm:$0xff]
        %v994 = vld [vmem:[#allocation5 + $0x90] sm:$0xff]
        %v995 = vld [vmem:[#allocation5 + $0x98] sm:$0xff]
        %v996 = vld [vmem:[#allocation5 + $0xa0] sm:$0xff]
        %v997 = vld [vmem:[#allocation5 + $0xa8] sm:$0xff]
        %v998 = vld [vmem:[#allocation5 + $0xb0] sm:$0xff]
        %v999 = vld [vmem:[#allocation5 + $0xb8] sm:$0xff]
        %v1000 = vld [vmem:[#allocation5 + $0xc0] sm:$0xff]
        %v1001 = vld [vmem:[#allocation5 + $0xc8] sm:$0xff]
        %v1002 = vld [vmem:[#allocation5 + $0xd0] sm:$0xff]
        %v1003 = vld [vmem:[#allocation5 + $0xd8] sm:$0xff]
        %1004 = vmatprep.subr.mxu0 0.0
        %1005 = vmatpush1.msra.mxu0 %v498
        %1006 = vmatprep.subr.mxu0 0.0
        %1007 = vmatpush1.msra.mxu0 %v503
        %1008 = vmatprep.subr.mxu0 0.0
        %1009 = vmatpush1.msra.mxu0 %v508
        %1010 = vmatprep.subr.mxu0 0.0
        %1011 = vmatpush1.msra.mxu0 %v513
        %1012 = vmatprep.subr.mxu0 0.0
        %1013 = vmatpush1.msra.mxu0 %v518
        %1014 = vmatprep.subr.mxu0 0.0
        %1015 = vmatpush1.msra.mxu0 %v523
        %1016 = vmatprep.subr.mxu0 0.0
        %1017 = vmatpush1.msra.mxu0 %v528
        %1018 = vmatprep.subr.mxu0 0.0
        %1019 = vmatpush1.msra.mxu0 %v533
        %1020 = vmatprep.subr.mxu0 0.0
        %1021 = vmatpush1.msra.mxu0 %v538
        %1022 = vmatprep.subr.mxu0 0.0
        %1023 = vmatpush1.msra.mxu0 %v543
        %1024 = vmatprep.subr.mxu0 0.0
        %1025 = vmatpush1.msra.mxu0 %v548
        %1026 = vmatprep.subr.mxu0 0.0
        %1027 = vmatpush1.msra.mxu0 %v553
        %1028 = vmatprep.subr.mxu0 0.0
        %1029 = vmatpush1.msra.mxu0 %v558
        %1030 = vmatprep.subr.mxu0 0.0
        %1031 = vmatpush1.msra.mxu0 %v563
        %1032 = vmatprep.subr.mxu0 0.0
        %1033 = vmatpush1.msra.mxu0 %v568
        %1034 = vmatprep.subr.mxu0 0.0
        %1035 = vmatpush1.msra.mxu0 %v573
        %1036 = vmatprep.subr.mxu0 0.0
        %1037 = vmatpush1.msra.mxu0 %v578
        %1038 = vmatprep.subr.mxu0 0.0
        %1039 = vmatpush1.msra.mxu0 %v583
        %1040 = vmatprep.subr.mxu0 0.0
        %1041 = vmatpush1.msra.mxu0 %v588
        %1042 = vmatprep.subr.mxu0 0.0
        %1043 = vmatpush1.msra.mxu0 %v593
        %1044 = vmatprep.subr.mxu0 0.0
        %1045 = vmatpush1.msra.mxu0 %v598
        %1046 = vmatprep.subr.mxu0 0.0
        %1047 = vmatpush1.msra.mxu0 %v603
        %1048 = vmatprep.subr.mxu0 0.0
        %1049 = vmatpush1.msra.mxu0 %v608
        %1050 = vmatprep.subr.mxu0 0.0
        %1051 = vmatpush1.msra.mxu0 %v613
        %1052 = vmatprep.subr.mxu0 0.0
        %1053 = vmatpush1.msra.mxu0 %v618
        %1054 = vmatprep.subr.mxu0 0.0
        %1055 = vmatpush1.msra.mxu0 %v623
        %1056 = vmatprep.subr.mxu0 0.0
        %1057 = vmatpush1.msra.mxu0 %v628
        %1058 = vmatprep.subr.mxu0 0.0
        %1059 = vmatpush1.msra.mxu0 %v633
        %1060 = vmatprep.subr.mxu0 0.0
        %1061 = vmatpush1.msra.mxu0 %v638
        %1062 = vmatprep.subr.mxu0 0.0
        %1063 = vmatpush1.msra.mxu0 %v643
        %1064 = vmatprep.subr.mxu0 0.0
        %1065 = vmatpush1.msra.mxu0 %v648
        %1066 = vmatprep.subr.mxu0 0.0
        %1067 = vmatpush1.msra.mxu0 %v653
        %1068 = vmatprep.mubr.f32.mxu0 %v977
        %1069 = vmatmul.mubr.f32.gmra.mrb[0].mxu0 %v976
        %v1070 = vpop.f32.mrb[0].mxu0
        %v1071 = vadd.f32 0.0, %v1070
        %v1072 = vpop.f32.mrb[0].mxu0
        %1073 = vmatprep.mubr.f32.mxu0 %v979
        %1074 = vmatmul.mubr.f32.gmra.mrb[0].mxu0 %v978
        %v1075 = vpop.f32.mrb[0].mxu0
        %v1076 = vadd.f32 0.0, %v1075
        %v1077 = vpop.f32.mrb[0].mxu0
        %1078 = vmatprep.mubr.f32.mxu0 %v981
        %1079 = vmatmul.mubr.f32.gmra.mrb[0].mxu0 %v980
        %v1080 = vpop.f32.mrb[0].mxu0
        %v1081 = vadd.f32 0.0, %v1080
        %v1082 = vpop.f32.mrb[0].mxu0
        %1083 = vmatprep.mubr.f32.mxu0 %v983
        %1084 = vmatmul.mubr.f32.gmra.mrb[0].mxu0 %v982
        %v1085 = vpop.f32.mrb[0].mxu0
        %v1086 = vadd.f32 0.0, %v1085
        %v1087 = vpop.f32.mrb[0].mxu0
        %1088 = vmatprep.mubr.f32.mxu0 %v985
        %1089 = vmatmul.mubr.f32.gmra.mrb[0].mxu0 %v984
        %v1090 = vpop.f32.mrb[0].mxu0
        %v1091 = vadd.f32 0.0, %v1090
        %v1092 = vpop.f32.mrb[0].mxu0
        %1093 = vmatprep.mubr.f32.mxu0 %v987
        %1094 = vmatmul.mubr.f32.gmra.mrb[0].mxu0 %v986
        %v1095 = vpop.f32.mrb[0].mxu0
        %v1096 = vadd.f32 0.0, %v1095
        %v1097 = vpop.f32.mrb[0].mxu0
        %1098 = vmatprep.mubr.f32.mxu0 %v989
        %1099 = vmatmul.mubr.f32.gmra.mrb[0].mxu0 %v988
        %v1100 = vpop.f32.mrb[0].mxu0
        %v1101 = vadd.f32 0.0, %v1100
        %v1102 = vpop.f32.mrb[0].mxu0
        %1103 = vmatprep.mubr.f32.mxu0 %v991
        %1104 = vmatmul.mubr.f32.gmra.mrb[0].mxu0 %v990
        %v1105 = vpop.f32.mrb[0].mxu0
        %v1106 = vadd.f32 0.0, %v1105
        %v1107 = vpop.f32.mrb[0].mxu0
        %1108 = vmatprep.mubr.f32.mxu0 %v993
        %1109 = vmatmul.mubr.f32.gmra.mrb[0].mxu0 %v992
        %v1110 = vpop.f32.mrb[0].mxu0
        %v1111 = vadd.f32 0.0, %v1110
        %v1112 = vpop.f32.mrb[0].mxu0
        %1113 = vmatprep.mubr.f32.mxu0 %v995
        %1114 = vmatmul.mubr.f32.gmra.mrb[0].mxu0 %v994
        %v1115 = vpop.f32.mrb[0].mxu0
        %v1116 = vadd.f32 0.0, %v1115
        %v1117 = vpop.f32.mrb[0].mxu0
        %1118 = vmatprep.mubr.f32.mxu0 %v997
        %1119 = vmatmul.mubr.f32.gmra.mrb[0].mxu0 %v996
        %v1120 = vpop.f32.mrb[0].mxu0
        %v1121 = vadd.f32 0.0, %v1120
        %v1122 = vpop.f32.mrb[0].mxu0
        %1123 = vmatprep.mubr.f32.mxu0 %v999
        %1124 = vmatmul.mubr.f32.gmra.mrb[0].mxu0 %v998
        %v1125 = vpop.f32.mrb[0].mxu0
        %v1126 = vadd.f32 0.0, %v1125
        %v1127 = vpop.f32.mrb[0].mxu0
        %1128 = vmatprep.mubr.f32.mxu0 %v1001
        %1129 = vmatmul.mubr.f32.gmra.mrb[0].mxu0 %v1000
        %v1130 = vpop.f32.mrb[0].mxu0
        %v1131 = vadd.f32 0.0, %v1130
        %v1132 = vpop.f32.mrb[0].mxu0
        %1133 = vmatprep.mubr.f32.mxu0 %v1003
        %1134 = vmatmul.mubr.f32.gmra.mrb[0].mxu0 %v1002
        %v1135 = vpop.f32.mrb[0].mxu0
        %v1136 = vadd.f32 0.0, %v1135
        %v1137 = vpop.f32.mrb[0].mxu0
        %1138 = vdwg.mxu0
        %vm1139 = vcmask 916480
        %1140 = vst.msk [vmem:[%s204] sm:$0xff] %vm1139, %v1071
        %1141 = vst.msk [vmem:[%s204 + $0x8] sm:$0xff] %vm1139, %v1076
        %1142 = vst.msk [vmem:[%s204 + $0x10] sm:$0xff] %vm1139, %v1081
        %1143 = vst.msk [vmem:[%s204 + $0x18] sm:$0xff] %vm1139, %v1086
        %1144 = vst.msk [vmem:[%s204 + $0x20] sm:$0xff] %vm1139, %v1091
        %1145 = vst.msk [vmem:[%s204 + $0x28] sm:$0xff] %vm1139, %v1096
        %1146 = vst.msk [vmem:[%s204 + $0x30] sm:$0xff] %vm1139, %v1101
        %1147 = vst.msk [vmem:[%s204 + $0x38] sm:$0xff] %vm1139, %v1106
        %1148 = vst.msk [vmem:[%s204 + $0x40] sm:$0xff] %vm1139, %v1111
        %1149 = vst.msk [vmem:[%s204 + $0x48] sm:$0xff] %vm1139, %v1116
        %1150 = vst.msk [vmem:[%s204 + $0x50] sm:$0xff] %vm1139, %v1121
        %1151 = vst.msk [vmem:[%s204 + $0x58] sm:$0xff] %vm1139, %v1126
        %1152 = vst.msk [vmem:[%s204 + $0x60] sm:$0xff] %vm1139, %v1131
        %1153 = vst.msk [vmem:[%s204 + $0x68] sm:$0xff] %vm1139, %v1136
        %v1154 = vld [vmem:[#allocation5] sm:$0xff]
        %v1155 = vld [vmem:[#allocation5 + $0x8] sm:$0xff]
        %v1156 = vld [vmem:[#allocation5 + $0x10] sm:$0xff]
        %v1157 = vld [vmem:[#allocation5 + $0x18] sm:$0xff]
        %v1158 = vld [vmem:[#allocation5 + $0x20] sm:$0xff]
        %v1159 = vld [vmem:[#allocation5 + $0x28] sm:$0xff]
        %v1160 = vld [vmem:[#allocation5 + $0x30] sm:$0xff]
        %v1161 = vld [vmem:[#allocation5 + $0x38] sm:$0xff]
        %v1162 = vld [vmem:[#allocation5 + $0x40] sm:$0xff]
        %v1163 = vld [vmem:[#allocation5 + $0x48] sm:$0xff]
        %v1164 = vld [vmem:[#allocation5 + $0x50] sm:$0xff]
        %v1165 = vld [vmem:[#allocation5 + $0x58] sm:$0xff]
        %v1166 = vld [vmem:[#allocation5 + $0x60] sm:$0xff]
        %v1167 = vld [vmem:[#allocation5 + $0x68] sm:$0xff]
        %v1168 = vld [vmem:[#allocation5 + $0x70] sm:$0xff]
        %v1169 = vld [vmem:[#allocation5 + $0x78] sm:$0xff]
        %v1170 = vld [vmem:[#allocation5 + $0x80] sm:$0xff]
        %v1171 = vld [vmem:[#allocation5 + $0x88] sm:$0xff]
        %v1172 = vld [vmem:[#allocation5 + $0x90] sm:$0xff]
        %v1173 = vld [vmem:[#allocation5 + $0x98] sm:$0xff]
        %v1174 = vld [vmem:[#allocation5 + $0xa0] sm:$0xff]
        %v1175 = vld [vmem:[#allocation5 + $0xa8] sm:$0xff]
        %v1176 = vld [vmem:[#allocation5 + $0xb0] sm:$0xff]
        %v1177 = vld [vmem:[#allocation5 + $0xb8] sm:$0xff]
        %v1178 = vld [vmem:[#allocation5 + $0xc0] sm:$0xff]
        %v1179 = vld [vmem:[#allocation5 + $0xc8] sm:$0xff]
        %v1180 = vld [vmem:[#allocation5 + $0xd0] sm:$0xff]
        %v1181 = vld [vmem:[#allocation5 + $0xd8] sm:$0xff]
        %1182 = vmatprep.subr.mxu0 0.0
        %1183 = vmatpush1.msra.mxu0 %v658
        %1184 = vmatprep.subr.mxu0 0.0
        %1185 = vmatpush1.msra.mxu0 %v663
        %1186 = vmatprep.subr.mxu0 0.0
        %1187 = vmatpush1.msra.mxu0 %v668
        %1188 = vmatprep.subr.mxu0 0.0
        %1189 = vmatpush1.msra.mxu0 %v673
        %1190 = vmatprep.subr.mxu0 0.0
        %1191 = vmatpush1.msra.mxu0 %v678
        %1192 = vmatprep.subr.mxu0 0.0
        %1193 = vmatpush1.msra.mxu0 %v683
        %1194 = vmatprep.subr.mxu0 0.0
        %1195 = vmatpush1.msra.mxu0 %v688
        %1196 = vmatprep.subr.mxu0 0.0
        %1197 = vmatpush1.msra.mxu0 %v693
        %1198 = vmatprep.subr.mxu0 0.0
        %1199 = vmatpush1.msra.mxu0 %v698
        %1200 = vmatprep.subr.mxu0 0.0
        %1201 = vmatpush1.msra.mxu0 %v703
        %1202 = vmatprep.subr.mxu0 0.0
        %1203 = vmatpush1.msra.mxu0 %v708
        %1204 = vmatprep.subr.mxu0 0.0
        %1205 = vmatpush1.msra.mxu0 %v713
        %1206 = vmatprep.subr.mxu0 0.0
        %1207 = vmatpush1.msra.mxu0 %v718
        %1208 = vmatprep.subr.mxu0 0.0
        %1209 = vmatpush1.msra.mxu0 %v723
        %1210 = vmatprep.subr.mxu0 0.0
        %1211 = vmatpush1.msra.mxu0 %v728
        %1212 = vmatprep.subr.mxu0 0.0
        %1213 = vmatpush1.msra.mxu0 %v733
        %1214 = vmatprep.subr.mxu0 0.0
        %1215 = vmatpush1.msra.mxu0 %v738
        %1216 = vmatprep.subr.mxu0 0.0
        %1217 = vmatpush1.msra.mxu0 %v743
        %1218 = vmatprep.subr.mxu0 0.0
        %1219 = vmatpush1.msra.mxu0 %v748
        %1220 = vmatprep.subr.mxu0 0.0
        %1221 = vmatpush1.msra.mxu0 %v753
        %1222 = vmatprep.subr.mxu0 0.0
        %1223 = vmatpush1.msra.mxu0 %v758
        %1224 = vmatprep.subr.mxu0 0.0
        %1225 = vmatpush1.msra.mxu0 %v763
        %1226 = vmatprep.subr.mxu0 0.0
        %1227 = vmatpush1.msra.mxu0 %v768
        %1228 = vmatprep.subr.mxu0 0.0
        %1229 = vmatpush1.msra.mxu0 %v773
        %1230 = vmatprep.subr.mxu0 0.0
        %1231 = vmatpush1.msra.mxu0 %v778
        %1232 = vmatprep.subr.mxu0 0.0
        %1233 = vmatpush1.msra.mxu0 %v783
        %1234 = vmatprep.subr.mxu0 0.0
        %1235 = vmatpush1.msra.mxu0 %v788
        %1236 = vmatprep.subr.mxu0 0.0
        %1237 = vmatpush1.msra.mxu0 %v793
        %1238 = vmatprep.subr.mxu0 0.0
        %1239 = vmatpush1.msra.mxu0 %v798
        %1240 = vmatprep.subr.mxu0 0.0
        %1241 = vmatpush1.msra.mxu0 %v803
        %1242 = vmatprep.subr.mxu0 0.0
        %1243 = vmatpush1.msra.mxu0 %v808
        %1244 = vmatprep.subr.mxu0 0.0
        %1245 = vmatpush1.msra.mxu0 %v813
        %1246 = vmatprep.mubr.f32.mxu0 %v1155
        %1247 = vmatmul.mubr.f32.gmra.mrb[0].mxu0 %v1154
        %v1248 = vpop.f32.mrb[0].mxu0
        %v1249 = vadd.f32 0.0, %v1248
        %v1250 = vpop.f32.mrb[0].mxu0
        %1251 = vmatprep.mubr.f32.mxu0 %v1157
        %1252 = vmatmul.mubr.f32.gmra.mrb[0].mxu0 %v1156
        %v1253 = vpop.f32.mrb[0].mxu0
        %v1254 = vadd.f32 0.0, %v1253
        %v1255 = vpop.f32.mrb[0].mxu0
        %1256 = vmatprep.mubr.f32.mxu0 %v1159
        %1257 = vmatmul.mubr.f32.gmra.mrb[0].mxu0 %v1158
        %v1258 = vpop.f32.mrb[0].mxu0
        %v1259 = vadd.f32 0.0, %v1258
        %v1260 = vpop.f32.mrb[0].mxu0
        %1261 = vmatprep.mubr.f32.mxu0 %v1161
        %1262 = vmatmul.mubr.f32.gmra.mrb[0].mxu0 %v1160
        %v1263 = vpop.f32.mrb[0].mxu0
        %v1264 = vadd.f32 0.0, %v1263
        %v1265 = vpop.f32.mrb[0].mxu0
        %1266 = vmatprep.mubr.f32.mxu0 %v1163
        %1267 = vmatmul.mubr.f32.gmra.mrb[0].mxu0 %v1162
        %v1268 = vpop.f32.mrb[0].mxu0
        %v1269 = vadd.f32 0.0, %v1268
        %v1270 = vpop.f32.mrb[0].mxu0
        %1271 = vmatprep.mubr.f32.mxu0 %v1165
        %1272 = vmatmul.mubr.f32.gmra.mrb[0].mxu0 %v1164
        %v1273 = vpop.f32.mrb[0].mxu0
        %v1274 = vadd.f32 0.0, %v1273
        %v1275 = vpop.f32.mrb[0].mxu0
        %1276 = vmatprep.mubr.f32.mxu0 %v1167
        %1277 = vmatmul.mubr.f32.gmra.mrb[0].mxu0 %v1166
        %v1278 = vpop.f32.mrb[0].mxu0
        %v1279 = vadd.f32 0.0, %v1278
        %v1280 = vpop.f32.mrb[0].mxu0
        %1281 = vmatprep.mubr.f32.mxu0 %v1169
        %1282 = vmatmul.mubr.f32.gmra.mrb[0].mxu0 %v1168
        %v1283 = vpop.f32.mrb[0].mxu0
        %v1284 = vadd.f32 0.0, %v1283
        %v1285 = vpop.f32.mrb[0].mxu0
        %1286 = vmatprep.mubr.f32.mxu0 %v1171
        %1287 = vmatmul.mubr.f32.gmra.mrb[0].mxu0 %v1170
        %v1288 = vpop.f32.mrb[0].mxu0
        %v1289 = vadd.f32 0.0, %v1288
        %v1290 = vpop.f32.mrb[0].mxu0
        %1291 = vmatprep.mubr.f32.mxu0 %v1173
        %1292 = vmatmul.mubr.f32.gmra.mrb[0].mxu0 %v1172
        %v1293 = vpop.f32.mrb[0].mxu0
        %v1294 = vadd.f32 0.0, %v1293
        %v1295 = vpop.f32.mrb[0].mxu0
        %1296 = vmatprep.mubr.f32.mxu0 %v1175
        %1297 = vmatmul.mubr.f32.gmra.mrb[0].mxu0 %v1174
        %v1298 = vpop.f32.mrb[0].mxu0
        %v1299 = vadd.f32 0.0, %v1298
        %v1300 = vpop.f32.mrb[0].mxu0
        %1301 = vmatprep.mubr.f32.mxu0 %v1177
        %1302 = vmatmul.mubr.f32.gmra.mrb[0].mxu0 %v1176
        %v1303 = vpop.f32.mrb[0].mxu0
        %v1304 = vadd.f32 0.0, %v1303
        %v1305 = vpop.f32.mrb[0].mxu0
        %1306 = vmatprep.mubr.f32.mxu0 %v1179
        %1307 = vmatmul.mubr.f32.gmra.mrb[0].mxu0 %v1178
        %v1308 = vpop.f32.mrb[0].mxu0
        %v1309 = vadd.f32 0.0, %v1308
        %v1310 = vpop.f32.mrb[0].mxu0
        %1311 = vmatprep.mubr.f32.mxu0 %v1181
        %1312 = vmatmul.mubr.f32.gmra.mrb[0].mxu0 %v1180
        %v1313 = vpop.f32.mrb[0].mxu0
        %v1314 = vadd.f32 0.0, %v1313
        %v1315 = vpop.f32.mrb[0].mxu0
        %1316 = vdwg.mxu0
        %1317 = vst.msk [vmem:[%s204 + $0x70] sm:$0xff] %vm1139, %v1249
        %1318 = vst.msk [vmem:[%s204 + $0x78] sm:$0xff] %vm1139, %v1254
        %1319 = vst.msk [vmem:[%s204 + $0x80] sm:$0xff] %vm1139, %v1259
        %1320 = vst.msk [vmem:[%s204 + $0x88] sm:$0xff] %vm1139, %v1264
        %1321 = vst.msk [vmem:[%s204 + $0x90] sm:$0xff] %vm1139, %v1269
        %1322 = vst.msk [vmem:[%s204 + $0x98] sm:$0xff] %vm1139, %v1274
        %1323 = vst.msk [vmem:[%s204 + $0xa0] sm:$0xff] %vm1139, %v1279
        %1324 = vst.msk [vmem:[%s204 + $0xa8] sm:$0xff] %vm1139, %v1284
        %1325 = vst.msk [vmem:[%s204 + $0xb0] sm:$0xff] %vm1139, %v1289
        %1326 = vst.msk [vmem:[%s204 + $0xb8] sm:$0xff] %vm1139, %v1294
        %1327 = vst.msk [vmem:[%s204 + $0xc0] sm:$0xff] %vm1139, %v1299
        %1328 = vst.msk [vmem:[%s204 + $0xc8] sm:$0xff] %vm1139, %v1304
        %1329 = vst.msk [vmem:[%s204 + $0xd0] sm:$0xff] %vm1139, %v1309
        %1330 = vst.msk [vmem:[%s204 + $0xd8] sm:$0xff] %vm1139, %v1314
        %v1331 = vld [vmem:[#allocation5] sm:$0xff]
        %v1332 = vld [vmem:[#allocation5 + $0x8] sm:$0xff]
        %v1333 = vld [vmem:[#allocation5 + $0x10] sm:$0xff]
        %v1334 = vld [vmem:[#allocation5 + $0x18] sm:$0xff]
        %v1335 = vld [vmem:[#allocation5 + $0x20] sm:$0xff]
        %v1336 = vld [vmem:[#allocation5 + $0x28] sm:$0xff]
        %v1337 = vld [vmem:[#allocation5 + $0x30] sm:$0xff]
        %v1338 = vld [vmem:[#allocation5 + $0x38] sm:$0xff]
        %v1339 = vld [vmem:[#allocation5 + $0x40] sm:$0xff]
        %v1340 = vld [vmem:[#allocation5 + $0x48] sm:$0xff]
        %v1341 = vld [vmem:[#allocation5 + $0x50] sm:$0xff]
        %v1342 = vld [vmem:[#allocation5 + $0x58] sm:$0xff]
        %v1343 = vld [vmem:[#allocation5 + $0x60] sm:$0xff]
        %v1344 = vld [vmem:[#allocation5 + $0x68] sm:$0xff]
        %v1345 = vld [vmem:[#allocation5 + $0x70] sm:$0xff]
        %v1346 = vld [vmem:[#allocation5 + $0x78] sm:$0xff]
        %v1347 = vld [vmem:[#allocation5 + $0x80] sm:$0xff]
        %v1348 = vld [vmem:[#allocation5 + $0x88] sm:$0xff]
        %v1349 = vld [vmem:[#allocation5 + $0x90] sm:$0xff]
        %v1350 = vld [vmem:[#allocation5 + $0x98] sm:$0xff]
        %v1351 = vld [vmem:[#allocation5 + $0xa0] sm:$0xff]
        %v1352 = vld [vmem:[#allocation5 + $0xa8] sm:$0xff]
        %v1353 = vld [vmem:[#allocation5 + $0xb0] sm:$0xff]
        %v1354 = vld [vmem:[#allocation5 + $0xb8] sm:$0xff]
        %v1355 = vld [vmem:[#allocation5 + $0xc0] sm:$0xff]
        %v1356 = vld [vmem:[#allocation5 + $0xc8] sm:$0xff]
        %v1357 = vld [vmem:[#allocation5 + $0xd0] sm:$0xff]
        %v1358 = vld [vmem:[#allocation5 + $0xd8] sm:$0xff]
        %1359 = vmatprep.subr.mxu0 0.0
        %1360 = vmatpush1.msra.mxu0 %v818
        %1361 = vmatprep.subr.mxu0 0.0
        %1362 = vmatpush1.msra.mxu0 %v823
        %1363 = vmatprep.subr.mxu0 0.0
        %1364 = vmatpush1.msra.mxu0 %v828
        %1365 = vmatprep.subr.mxu0 0.0
        %1366 = vmatpush1.msra.mxu0 %v833
        %1367 = vmatprep.subr.mxu0 0.0
        %1368 = vmatpush1.msra.mxu0 %v838
        %1369 = vmatprep.subr.mxu0 0.0
        %1370 = vmatpush1.msra.mxu0 %v843
        %1371 = vmatprep.subr.mxu0 0.0
        %1372 = vmatpush1.msra.mxu0 %v848
        %1373 = vmatprep.subr.mxu0 0.0
        %1374 = vmatpush1.msra.mxu0 %v853
        %1375 = vmatprep.subr.mxu0 0.0
        %1376 = vmatpush1.msra.mxu0 %v858
        %1377 = vmatprep.subr.mxu0 0.0
        %1378 = vmatpush1.msra.mxu0 %v863
        %1379 = vmatprep.subr.mxu0 0.0
        %1380 = vmatpush1.msra.mxu0 %v868
        %1381 = vmatprep.subr.mxu0 0.0
        %1382 = vmatpush1.msra.mxu0 %v873
        %1383 = vmatprep.subr.mxu0 0.0
        %1384 = vmatpush1.msra.mxu0 %v878
        %1385 = vmatprep.subr.mxu0 0.0
        %1386 = vmatpush1.msra.mxu0 %v883
        %1387 = vmatprep.subr.mxu0 0.0
        %1388 = vmatpush1.msra.mxu0 %v888
        %1389 = vmatprep.subr.mxu0 0.0
        %1390 = vmatpush1.msra.mxu0 %v893
        %1391 = vmatprep.subr.mxu0 0.0
        %1392 = vmatpush1.msra.mxu0 %v898
        %1393 = vmatprep.subr.mxu0 0.0
        %1394 = vmatpush1.msra.mxu0 %v903
        %1395 = vmatprep.subr.mxu0 0.0
        %1396 = vmatpush1.msra.mxu0 %v908
        %1397 = vmatprep.subr.mxu0 0.0
        %1398 = vmatpush1.msra.mxu0 %v913
        %1399 = vmatprep.subr.mxu0 0.0
        %1400 = vmatpush1.msra.mxu0 %v918
        %1401 = vmatprep.subr.mxu0 0.0
        %1402 = vmatpush1.msra.mxu0 %v923
        %1403 = vmatprep.subr.mxu0 0.0
        %1404 = vmatpush1.msra.mxu0 %v928
        %1405 = vmatprep.subr.mxu0 0.0
        %1406 = vmatpush1.msra.mxu0 %v933
        %1407 = vmatprep.subr.mxu0 0.0
        %1408 = vmatpush1.msra.mxu0 %v938
        %1409 = vmatprep.subr.mxu0 0.0
        %1410 = vmatpush1.msra.mxu0 %v943
        %1411 = vmatprep.subr.mxu0 0.0
        %1412 = vmatpush1.msra.mxu0 %v948
        %1413 = vmatprep.subr.mxu0 0.0
        %1414 = vmatpush1.msra.mxu0 %v953
        %1415 = vmatprep.subr.mxu0 0.0
        %1416 = vmatpush1.msra.mxu0 %v958
        %1417 = vmatprep.subr.mxu0 0.0
        %1418 = vmatpush1.msra.mxu0 %v963
        %1419 = vmatprep.subr.mxu0 0.0
        %1420 = vmatpush1.msra.mxu0 %v968
        %1421 = vmatprep.subr.mxu0 0.0
        %1422 = vmatpush1.msra.mxu0 %v973
        %1423 = vmatprep.mubr.f32.mxu0 %v1332
        %1424 = vmatmul.mubr.f32.gmra.mrb[0].mxu0 %v1331
        %v1425 = vpop.f32.mrb[0].mxu0
        %v1426 = vadd.f32 0.0, %v1425
        %v1427 = vpop.f32.mrb[0].mxu0
        %1428 = vmatprep.mubr.f32.mxu0 %v1334
        %1429 = vmatmul.mubr.f32.gmra.mrb[0].mxu0 %v1333
        %v1430 = vpop.f32.mrb[0].mxu0
        %v1431 = vadd.f32 0.0, %v1430
        %v1432 = vpop.f32.mrb[0].mxu0
        %1433 = vmatprep.mubr.f32.mxu0 %v1336
        %1434 = vmatmul.mubr.f32.gmra.mrb[0].mxu0 %v1335
        %v1435 = vpop.f32.mrb[0].mxu0
        %v1436 = vadd.f32 0.0, %v1435
        %v1437 = vpop.f32.mrb[0].mxu0
        %1438 = vmatprep.mubr.f32.mxu0 %v1338
        %1439 = vmatmul.mubr.f32.gmra.mrb[0].mxu0 %v1337
        %v1440 = vpop.f32.mrb[0].mxu0
        %v1441 = vadd.f32 0.0, %v1440
        %v1442 = vpop.f32.mrb[0].mxu0
        %1443 = vmatprep.mubr.f32.mxu0 %v1340
        %1444 = vmatmul.mubr.f32.gmra.mrb[0].mxu0 %v1339
        %v1445 = vpop.f32.mrb[0].mxu0
        %v1446 = vadd.f32 0.0, %v1445
        %v1447 = vpop.f32.mrb[0].mxu0
        %1448 = vmatprep.mubr.f32.mxu0 %v1342
        %1449 = vmatmul.mubr.f32.gmra.mrb[0].mxu0 %v1341
        %v1450 = vpop.f32.mrb[0].mxu0
        %v1451 = vadd.f32 0.0, %v1450
        %v1452 = vpop.f32.mrb[0].mxu0
        %1453 = vmatprep.mubr.f32.mxu0 %v1344
        %1454 = vmatmul.mubr.f32.gmra.mrb[0].mxu0 %v1343
        %v1455 = vpop.f32.mrb[0].mxu0
        %v1456 = vadd.f32 0.0, %v1455
        %v1457 = vpop.f32.mrb[0].mxu0
        %1458 = vmatprep.mubr.f32.mxu0 %v1346
        %1459 = vmatmul.mubr.f32.gmra.mrb[0].mxu0 %v1345
        %v1460 = vpop.f32.mrb[0].mxu0
        %v1461 = vadd.f32 0.0, %v1460
        %v1462 = vpop.f32.mrb[0].mxu0
        %1463 = vmatprep.mubr.f32.mxu0 %v1348
        %1464 = vmatmul.mubr.f32.gmra.mrb[0].mxu0 %v1347
        %v1465 = vpop.f32.mrb[0].mxu0
        %v1466 = vadd.f32 0.0, %v1465
        %v1467 = vpop.f32.mrb[0].mxu0
        %1468 = vmatprep.mubr.f32.mxu0 %v1350
        %1469 = vmatmul.mubr.f32.gmra.mrb[0].mxu0 %v1349
        %v1470 = vpop.f32.mrb[0].mxu0
        %v1471 = vadd.f32 0.0, %v1470
        %v1472 = vpop.f32.mrb[0].mxu0
        %1473 = vmatprep.mubr.f32.mxu0 %v1352
        %1474 = vmatmul.mubr.f32.gmra.mrb[0].mxu0 %v1351
        %v1475 = vpop.f32.mrb[0].mxu0
        %v1476 = vadd.f32 0.0, %v1475
        %v1477 = vpop.f32.mrb[0].mxu0
        %1478 = vmatprep.mubr.f32.mxu0 %v1354
        %1479 = vmatmul.mubr.f32.gmra.mrb[0].mxu0 %v1353
        %v1480 = vpop.f32.mrb[0].mxu0
        %v1481 = vadd.f32 0.0, %v1480
        %v1482 = vpop.f32.mrb[0].mxu0
        %1483 = vmatprep.mubr.f32.mxu0 %v1356
        %1484 = vmatmul.mubr.f32.gmra.mrb[0].mxu0 %v1355
        %v1485 = vpop.f32.mrb[0].mxu0
        %v1486 = vadd.f32 0.0, %v1485
        %v1487 = vpop.f32.mrb[0].mxu0
        %1488 = vmatprep.mubr.f32.mxu0 %v1358
        %1489 = vmatmul.mubr.f32.gmra.mrb[0].mxu0 %v1357
        %v1490 = vpop.f32.mrb[0].mxu0
        %v1491 = vadd.f32 0.0, %v1490
        %v1492 = vpop.f32.mrb[0].mxu0
        %1493 = vdwg.mxu0
        %1494 = vst.msk [vmem:[%s204 + $0xe0] sm:$0xff] %vm1139, %v1426
        %1495 = vst.msk [vmem:[%s204 + $0xe8] sm:$0xff] %vm1139, %v1431
        %1496 = vst.msk [vmem:[%s204 + $0xf0] sm:$0xff] %vm1139, %v1436
        %1497 = vst.msk [vmem:[%s204 + $0xf8] sm:$0xff] %vm1139, %v1441
        %1498 = vst.msk [vmem:[%s204 + $0x100] sm:$0xff] %vm1139, %v1446
        %1499 = vst.msk [vmem:[%s204 + $0x108] sm:$0xff] %vm1139, %v1451
        %1500 = vst.msk [vmem:[%s204 + $0x110] sm:$0xff] %vm1139, %v1456
        %1501 = vst.msk [vmem:[%s204 + $0x118] sm:$0xff] %vm1139, %v1461
        %1502 = vst.msk [vmem:[%s204 + $0x120] sm:$0xff] %vm1139, %v1466
        %1503 = vst.msk [vmem:[%s204 + $0x128] sm:$0xff] %vm1139, %v1471
        %1504 = vst.msk [vmem:[%s204 + $0x130] sm:$0xff] %vm1139, %v1476
        %1505 = vst.msk [vmem:[%s204 + $0x138] sm:$0xff] %vm1139, %v1481
        %1506 = vst.msk [vmem:[%s204 + $0x140] sm:$0xff] %vm1139, %v1486
        %1507 = vst.msk [vmem:[%s204 + $0x148] sm:$0xff] %vm1139, %v1491
        %s1508 = sand.u32 %s97, 1
        %s1509 = scalar_lea.sflag [#allocation4], %s1508
        %s1510 = sand.u32 %s97, 1
        %s1511 = smul.addr %s1510, 336
        %s1512 = scalar_lea.vmem [#allocation7], %s1511
        // Predicated region
        $region41: #{tpu_custom_call.1} parent=31 // pred_check
          %p1513 = pneg %p107
        $region42: #{tpu_custom_call.1} parent=31 // pred_check_branch
          %1515 = sbr.rel (%p1513) target = $region44
        $region43: #{tpu_custom_call.1} parent=31 // pred_region
          %s1516 = smul.u32 42, %s21
          %s1518 = ssub.s32 5376, 5376
          %1519 = vsyncadd %s1509, %s1518
          %s1520 = smul.addr %s1516, 128
          %s1521 = scalar_lea.hbm %s3, %s1520
          %s1522 = sshll.u32 %s1512, 4
          %s1523 = int_to_ptr.vmem [resolvable:$true] %s1522
          %1528 = dma.vmem_to_hbm [thread:$0]  %s1523, 5376, %s1521, %s1509, 128, 128, 8
        $region44: #{tpu_custom_call.1} parent=31 // pred_fallthru
          _
      $region32: #{tpu_custom_call.1} parent=5 // pred_fallthru
        _
      %p1529 = scmp.le.s32.totalorder 2, %s16
      // Predicated region
      $region45: #{tpu_custom_call.1} parent=5 // pred_check
        %p1530 = pneg %p1529
      $region46: #{tpu_custom_call.1} parent=5 // pred_check_branch
        %1532 = sbr.rel (%p1530) target = $region48
      $region47: #{tpu_custom_call.1} parent=5 // pred_region
        %s1533 = ssub.s32 %s16, 2
        // Predicated region
        $region49: #{tpu_custom_call.1} parent=47 // pred_check
          %p1534 = pneg %p113
        $region50: #{tpu_custom_call.1} parent=47 // pred_check_branch
          %1536 = sbr.rel (%p1534) target = $region52
        $region51: #{tpu_custom_call.1} parent=47 // pred_region
          %s1537 = sand.u32 %s98, 1
          %s1538 = scalar_lea.sflag [#allocation4], %s1537
          %s1539 = sand.u32 %s98, 1
          %s1540 = smul.addr %s1539, 336
          %s1541 = scalar_lea.vmem [#allocation7], %s1540
          %1542 = dma.done %s1538, 5376
        $region52: #{tpu_custom_call.1} parent=47 // pred_fallthru
          _
      $region48: #{tpu_custom_call.1} parent=5 // pred_fallthru
        _
    $region6: #{tpu_custom_call.1} parent=1 // loop_footer
      %s20 = sadd.s32 1, %s16
    $region7: #{tpu_custom_call.1} parent=1 // loop_footer_branch
      %15 = sbr.rel target = $region3
    $region8: #{tpu_custom_call.1} parent=1 // loop_exit
      _
    %1543 = vsyncpa [#allocation3], 1
    %s1544 = scalar_lea.sflag [#allocation3], 1
    %1545 = vsyncpa %s1544, 1
    %1546 = vsyncpa [#allocation6], 1
    %1547 = vsyncpa [#allocation4], 1
    %s1548 = scalar_lea.sflag [#allocation4], 1
    %1549 = vsyncpa %s1548, 1

</llo_original>
